<compile_context>
chip_gen: v6e
topology: v6e:2x2x1
jax: 0.10.0
libtpu: 0.0.40
codegen_flags: <defaults>
</compile_context>

<pallas_src>
import functools

import jax
import jax.numpy as jnp
import numpy as np
from jax.experimental import pallas as pl
from jax.experimental.pallas import tpu as pltpu

EPS = 1e-5          # nn.LayerNorm default eps
NEG_INF = -1e30     # CLIP causal attention mask fill value


def _layernorm(x, w, b):
    mu = jnp.mean(x, axis=-1, keepdims=True)
    xc = x - mu
    var = jnp.mean(xc * xc, axis=-1, keepdims=True)
    return xc * jax.lax.rsqrt(var + EPS) * w + b


# ----------------------------- Pallas kernels -----------------------------

def _transformer_kernel(x_ref, pos_ref, mask_ref,
                        wqkv_ref, bqkv_ref, wo_ref, bo_ref,
                        ln1w_ref, ln1b_ref, ln2w_ref, ln2b_ref,
                        w1_ref, b1_ref, w2_ref, b2_ref,
                        o_ref, qkv_scr, ctx_scr, *, num_heads):
    """grid = (batch_blocks, layers).

    The output block index ignores the layer axis, so o_ref holds the residual
    stream in VMEM across all layers of one batch block (accumulator pattern);
    per-layer weight blocks are indexed by the layer axis and auto-prefetched.
    """
    layer = pl.program_id(1)

    @pl.when(layer == 0)
    def _():
        # x = prompts + positional_embedding, fused into the first layer
        o_ref[...] = x_ref[...] + pos_ref[...]

    x = o_ref[...]                                   # (TB, S, D) f32 residual
    TB, S, D = x.shape
    hd = D // num_heads
    x2 = x.reshape(TB * S, D)

    # ---- pre-LN multi-head self-attention (causal) ----
    h = _layernorm(x2, ln1w_ref[0], ln1b_ref[0]).astype(jnp.bfloat16)
    # wqkv_ref is pre-transposed (D, 3D) bf16 with 1/sqrt(hd) folded into Q.
    qkv = jnp.dot(h, wqkv_ref[0], preferred_element_type=jnp.float32) + bqkv_ref[0]
    # single bf16 cast of the whole qkv; the batch/head loop reads slices of it
    qkv_scr[...] = qkv.reshape(TB, S, 3 * D).astype(jnp.bfloat16)

    mask = mask_ref[...]                             # (S, S) f32: 0 / -inf

    def attn_body(b, carry):
        ctx_heads = []
        for hh in range(num_heads):                  # heads unrolled inside
            lo = hh * hd
            qh = qkv_scr[b, :, lo:lo + hd]           # (S, hd) bf16
            kh = qkv_scr[b, :, D + lo:D + lo + hd]
            vh = qkv_scr[b, :, 2 * D + lo:2 * D + lo + hd]
            # q @ k.T via dot_general (no materialized transpose); f32 scores
            s = jax.lax.dot_general(qh, kh, (((1,), (1,)), ((), ())),
                                    preferred_element_type=jnp.float32) + mask
            mx = jnp.max(s, axis=-1, keepdims=True)
            p = jnp.exp(s - mx)
            l = jnp.sum(p, axis=-1, keepdims=True)
            p = p * pl.reciprocal(l, approx=True)    # divide -> EUP slot
            ctx_heads.append(
                jnp.dot(p.astype(jnp.bfloat16), vh,
                        preferred_element_type=jnp.float32).astype(jnp.bfloat16))
        ctx_scr[b] = jnp.concatenate(ctx_heads, axis=-1)   # (S, D) bf16
        return carry

    jax.lax.fori_loop(0, TB, attn_body, 0)

    # ONE full-depth output projection: (TB*S, D) @ (D, D)
    attn = jnp.dot(ctx_scr[...].reshape(TB * S, D), wo_ref[0],
                   preferred_element_type=jnp.float32)
    x2 = x2 + attn + bo_ref[0]

    # ---- MLP: c_fc -> QuickGELU -> c_proj ----
    # (QuickGELU kept f32 so it is correct on v5e, which has no bf16 VPU/EUP.)
    h2 = _layernorm(x2, ln2w_ref[0], ln2b_ref[0]).astype(jnp.bfloat16)
    m = jnp.dot(h2, w1_ref[0], preferred_element_type=jnp.float32) + b1_ref[0]
    m = m * jax.nn.sigmoid(1.702 * m)                # QuickGELU
    m = jnp.dot(m.astype(jnp.bfloat16), w2_ref[0],
                preferred_element_type=jnp.float32) + b2_ref[0]
    x2 = x2 + m

    o_ref[...] = x2.reshape(TB, S, D).astype(o_ref.dtype)


def _final_kernel(x_ref, lnw_ref, lnb_ref, proj_ref, o_ref):
    """ln_final + @ text_projection on all B (already-gathered) EOT rows."""
    r = _layernorm(x_ref[...], lnw_ref[...], lnb_ref[...])        # (B, D)
    o_ref[...] = jnp.dot(r, proj_ref[...],
                         preferred_element_type=jnp.float32).astype(o_ref.dtype)


# ------------------------------- wrappers -------------------------------

_WEIGHT_KEYS = ("wqkv", "bqkv", "wo", "bo", "ln1w", "ln1b",
                "ln2w", "ln2b", "w1", "b1", "w2", "b2")


def _vmem_limit_bytes():
    """~80% of the detected chip's VMEM (v5e/v6e 128 MiB, v7x 64 MiB)."""
    cap = None
    try:
        info = pltpu.get_tpu_info()
        for name in ("vmem_capacity_bytes", "vmem_bytes", "vmem_size_bytes"):
            cap = getattr(info, name, None)
            if cap:
                break
    except Exception:
        cap = None
    if not cap:
        cap = 64 * 1024 * 1024          # conservative fallback: v7x per-TC VMEM
    return int(cap * 4 // 5)


def _choose_block_batch(batch, target=8):
    """Per-step batch tile.  Keeps >= 2 batch blocks when the batch allows so
    the 'parallel' batch axis can split across both TensorCores on v7x."""
    tb = min(target, batch)
    if batch > 1:
        tb = min(tb, -(-batch // 2))
    return max(tb, 1)


def _pad_seq_len(s):
    """Lane-friendly sequence length (real CLIP S=77 -> 128)."""
    if s % 128 == 0:
        return s
    if s <= 64:
        return s if s % 8 == 0 else -(-s // 8) * 8
    return -(-s // 128) * 128


def prepare_transformer_params(params):
    """Pre-transpose / pre-scale / bf16-cast all per-layer matmul weights and
    stack them along a leading layer axis (done once, outside the kernels)."""
    D = params["pos"].shape[-1]
    H = params["num_heads"]
    hd = D // H
    scale = 1.0 / (hd ** 0.5)
    bf16 = jnp.bfloat16

    wqkv, bqkv, wo, w1, w2 = [], [], [], [], []
    for lp in params["layers"]:
        wt = lp["wqkv"].T                                      # (D, 3D)
        wt = jnp.concatenate([wt[:, :D] * scale, wt[:, D:]], axis=1)
        wqkv.append(wt.astype(bf16))
        bq = lp["bqkv"]                                        # (1, 3D)
        bqkv.append(jnp.concatenate([bq[:, :D] * scale, bq[:, D:]], axis=1))
        wo.append(lp["wo"].T.astype(bf16))                     # single (D, D) slab
        w1.append(lp["w1"].T.astype(bf16))                     # (D, 4D)
        w2.append(lp["w2"].T.astype(bf16))                     # (4D, D)

    stack = lambda xs: jnp.stack(xs, axis=0)
    prep = {"wqkv": stack(wqkv), "bqkv": stack(bqkv), "wo": stack(wo),
            "w1": stack(w1), "w2": stack(w2)}
    for k in ("bo", "ln1w", "ln1b", "ln2w", "ln2b", "b1", "b2"):
        prep[k] = stack([lp[k] for lp in params["layers"]])
    return prep


def clip_transformer(x, pos, mask, prep, num_heads, *, block_batch):
    B, S, D = x.shape
    L = prep["wqkv"].shape[0]
    TB = block_batch
    assert B % TB == 0

    def layer_spec(a):
        nd = a.ndim
        return pl.BlockSpec((1,) + a.shape[1:],
                            lambda b, l, _n=nd: (l,) + (0,) * (_n - 1))

    def const_spec(a):
        nd = a.ndim
        return pl.BlockSpec(a.shape, lambda b, l, _n=nd: (0,) * _n)

    in_specs = [pl.BlockSpec((TB, S, D), lambda b, l: (b, 0, 0)),
                const_spec(pos), const_spec(mask)]
    in_specs += [layer_spec(prep[k]) for k in _WEIGHT_KEYS]

    return pl.pallas_call(
        functools.partial(_transformer_kernel, num_heads=num_heads),
        out_shape=jax.ShapeDtypeStruct((B, S, D), jnp.float32),
        grid=(B // TB, L),
        in_specs=in_specs,
        out_specs=pl.BlockSpec((TB, S, D), lambda b, l: (b, 0, 0)),
        scratch_shapes=[pltpu.VMEM((TB, S, 3 * D), jnp.bfloat16),   # qkv (bf16)
                        pltpu.VMEM((TB, S, D), jnp.bfloat16)],      # ctx (bf16)
        compiler_params=pltpu.CompilerParams(
            dimension_semantics=("parallel", "arbitrary"),
            vmem_limit_bytes=_vmem_limit_bytes()),
    )(x, pos, mask, *[prep[k] for k in _WEIGHT_KEYS])


def final_projection(x_eot, lnw, lnb, proj):
    """One grid step: LayerNorm + (B, D) @ (D, E) on the gathered EOT rows."""
    B, D = x_eot.shape
    E = proj.shape[1]
    return pl.pallas_call(
        _final_kernel,
        out_shape=jax.ShapeDtypeStruct((B, E), jnp.float32),
        grid=(1,),
        in_specs=[pl.BlockSpec((B, D), lambda i: (0, 0)),
                  pl.BlockSpec((1, D), lambda i: (0, 0)),
                  pl.BlockSpec((1, D), lambda i: (0, 0)),
                  pl.BlockSpec((D, E), lambda i: (0, 0))],
        out_specs=pl.BlockSpec((B, E), lambda i: (0, 0)),
    )(x_eot, lnw, lnb, proj)


def text_encoder_forward(prompts, tokenized_prompts, params, *, block_batch=8):
    """Equivalent of TextEncoder.forward(prompts, tokenized_prompts)."""
    B, S, D = prompts.shape
    prep = prepare_transformer_params(params)   # one-time weight prep (hoistable)

    # --- sequence padding to a lane-friendly length (safe under causal mask) ---
    S_pad = _pad_seq_len(S)
    pos = params["pos"]
    if S_pad != S:
        prompts = jnp.pad(prompts, ((0, 0), (0, S_pad - S), (0, 0)))
        pos = jnp.pad(pos, ((0, S_pad - S), (0, 0)))

    # --- batch tile + padding (>= 2 blocks for v7x megacore when possible) ---
    TB = _choose_block_batch(B, block_batch)
    B_pad = -(-B // TB) * TB
    if B_pad != B:
        prompts = jnp.pad(prompts, ((0, B_pad - B), (0, 0), (0, 0)))

    row = jnp.arange(S_pad)[:, None]
    col = jnp.arange(S_pad)[None, :]
    mask = jnp.where(col <= row, 0.0, NEG_INF).astype(jnp.float32)

    x = clip_transformer(prompts, pos, mask, prep,
                         params["num_heads"], block_batch=TB)

    # argmax over token ids selects the EOT position per prompt; gathering the
    # B rows is tiny glue best left to XLA, feeding one batched final kernel.
    eot = jnp.argmax(tokenized_prompts, axis=-1).astype(jnp.int32)
    x_eot = x[:B][jnp.arange(B), eot]                       # (B, D)
    return final_projection(x_eot, params["lnfw"], params["lnfb"], params["proj"])


# ------------------------- pure-JAX reference -------------------------

def reference_forward(prompts, tokenized_prompts, params):
    x = prompts + params["pos"]
    B, S, D = x.shape
    H = params["num_heads"]
    hd = D // H
    row = jnp.arange(S)[:, None]
    col = jnp.arange(S)[None, :]
    mask = jnp.where(col <= row, 0.0, NEG_INF).astype(jnp.float32)
    for lp in params["layers"]:
        h = _layernorm(x, lp["ln1w"], lp["ln1b"])
        qkv = h @ lp["wqkv"].T + lp["bqkv"]
        q, k, v = jnp.split(qkv, 3, axis=-1)
        q = q * (1.0 / hd ** 0.5)
        q = q.reshape(B, S, H, hd)
        k = k.reshape(B, S, H, hd)
        v = v.reshape(B, S, H, hd)
        s = jnp.einsum("bqhd,bkhd->bhqk", q, k) + mask
        p = jax.nn.softmax(s, axis=-1)
        a = jnp.einsum("bhqk,bkhd->bqhd", p, v).reshape(B, S, D)
        x = x + a @ lp["wo"].T + lp["bo"]
        h = _layernorm(x, lp["ln2w"], lp["ln2b"])
        h = h @ lp["w1"].T + lp["b1"]
        h = h * jax.nn.sigmoid(1.702 * h)
        x = x + h @ lp["w2"].T + lp["b2"]
    x = _layernorm(x, params["lnfw"], params["lnfb"])
    eot = jnp.argmax(tokenized_prompts, axis=-1)
    return x[jnp.arange(B), eot] @ params["proj"]


# ------------------- deterministic parameter init -------------------

def init_params(key, width, heads, layers, seq, embed_dim):
    keys = jax.random.split(key, 4 + layers)

    def nrm(k, shape, scale=0.02):
        return (scale * jax.random.normal(k, shape)).astype(jnp.float32)

    params = {
        "num_heads": heads,
        "pos": nrm(keys[0], (seq, width), 0.01),          # positional_embedding
        "lnfw": 1.0 + nrm(keys[1], (1, width), 0.1),      # ln_final.weight
        "lnfb": nrm(keys[2], (1, width), 0.1),            # ln_final.bias
        "proj": nrm(keys[3], (width, embed_dim)),         # text_projection
        "layers": [],
    }
    for i in range(layers):
        ks = jax.random.split(keys[4 + i], 12)
        params["layers"].append({
            "wqkv": nrm(ks[0], (3 * width, width)),
            "bqkv": nrm(ks[1], (1, 3 * width), 0.01),
            "wo":   nrm(ks[2], (width, width)),
            "bo":   nrm(ks[3], (1, width), 0.01),
            "ln1w": 1.0 + nrm(ks[4], (1, width), 0.1),
            "ln1b": nrm(ks[5], (1, width), 0.1),
            "ln2w": 1.0 + nrm(ks[6], (1, width), 0.1),
            "ln2b": nrm(ks[7], (1, width), 0.1),
            "w1":   nrm(ks[8], (4 * width, width)),
            "b1":   nrm(ks[9], (1, 4 * width), 0.01),
            "w2":   nrm(ks[10], (width, 4 * width)),
            "b2":   nrm(ks[11], (1, width), 0.01),
        })
    return params


if __name__ == "__main__":
    # batch, seq, width, heads, embed_dim, layers — small demo shapes
    B, S, D, H, E, L = 4, 16, 64, 4, 32, 3

    key = jax.random.PRNGKey(0)
    kp, kx, kt = jax.random.split(key, 3)
    params = init_params(kp, width=D, heads=H, layers=L, seq=S, embed_dim=E)

    prompts = (0.02 * jax.random.normal(kx, (B, S, D))).astype(jnp.float32)
    # synthetic token ids; the EOT token gets the largest id (CLIP convention)
    tokenized = jax.random.randint(kt, (B, S), 1, 100).astype(jnp.int32)
    eot_pos = jnp.array([5, 7, 2, S - 1], dtype=jnp.int32)
    tokenized = tokenized.at[jnp.arange(B), eot_pos].set(1000)

    out = text_encoder_forward(prompts, tokenized, params)
    out = jax.block_until_ready(out)
    assert out.shape == (B, E)

    # Reference: pure-JAX f32 math using the same bf16-rounded weight values
    # the kernels consume (the kernel keeps accumulation / residual in f32).
    def _r(a):
        return a.astype(jnp.bfloat16).astype(jnp.float32)
    ref_params = dict(params)
    ref_params["layers"] = [
        {**lp, "wqkv": _r(lp["wqkv"]), "wo": _r(lp["wo"]),
         "w1": _r(lp["w1"]), "w2": _r(lp["w2"])}
        for lp in params["layers"]
    ]
    ref = reference_forward(prompts, tokenized, ref_params)
    np.testing.assert_allclose(np.asarray(out), np.asarray(ref),
                               rtol=2e-2, atol=5e-3)
    print("KERNEL_OK")
</pallas_src>

<mosaic_0001>
module attributes {stable_mosaic.version = 11 : i64} {
  func.func @_transformer_kernel(%arg0: i32, %arg1: i32, %arg2: memref<2x16x64xf32, #tpu.memory_space<vmem>>, %arg3: memref<16x64xf32, #tpu.memory_space<vmem>>, %arg4: memref<16x16xf32, #tpu.memory_space<vmem>>, %arg5: memref<1x64x192xbf16, #tpu.memory_space<vmem>>, %arg6: memref<1x1x192xf32, #tpu.memory_space<vmem>>, %arg7: memref<1x64x64xbf16, #tpu.memory_space<vmem>>, %arg8: memref<1x1x64xf32, #tpu.memory_space<vmem>>, %arg9: memref<1x1x64xf32, #tpu.memory_space<vmem>>, %arg10: memref<1x1x64xf32, #tpu.memory_space<vmem>>, %arg11: memref<1x1x64xf32, #tpu.memory_space<vmem>>, %arg12: memref<1x1x64xf32, #tpu.memory_space<vmem>>, %arg13: memref<1x64x256xbf16, #tpu.memory_space<vmem>>, %arg14: memref<1x1x256xf32, #tpu.memory_space<vmem>>, %arg15: memref<1x256x64xbf16, #tpu.memory_space<vmem>>, %arg16: memref<1x1x64xf32, #tpu.memory_space<vmem>>, %arg17: memref<2x16x64xf32, #tpu.memory_space<vmem>>, %arg18: memref<2x16x192xbf16, #tpu.memory_space<vmem>>, %arg19: memref<2x16x64xbf16, #tpu.memory_space<vmem>>) attributes {dimension_semantics = [#tpu.dimension_semantics<parallel>, #tpu.dimension_semantics<arbitrary>], iteration_bounds = array<i64: 2, 3>, scalar_prefetch = 0 : i64, scratch_operands = 2 : i64, tpu.core_type = #tpu.core_type<tc>, window_params = [{transform_indices = @transform_0, window_bounds = array<i64: 2, 16, 64>}, {pipeline_mode = #tpu.pipeline_mode<synchronous>, transform_indices = @transform_1, window_bounds = array<i64: 16, 64>}, {pipeline_mode = #tpu.pipeline_mode<synchronous>, transform_indices = @transform_2, window_bounds = array<i64: 16, 16>}, {transform_indices = @transform_3, window_bounds = array<i64: 1, 64, 192>}, {transform_indices = @transform_4, window_bounds = array<i64: 1, 1, 192>}, {transform_indices = @transform_5, window_bounds = array<i64: 1, 64, 64>}, {transform_indices = @transform_6, window_bounds = array<i64: 1, 1, 64>}, {transform_indices = @transform_7, window_bounds = array<i64: 1, 1, 64>}, {transform_indices = @transform_8, window_bounds = array<i64: 1, 1, 64>}, {transform_indices = @transform_9, window_bounds = array<i64: 1, 1, 64>}, {transform_indices = @transform_10, window_bounds = array<i64: 1, 1, 64>}, {transform_indices = @transform_11, window_bounds = array<i64: 1, 64, 256>}, {transform_indices = @transform_12, window_bounds = array<i64: 1, 1, 256>}, {transform_indices = @transform_13, window_bounds = array<i64: 1, 256, 64>}, {transform_indices = @transform_14, window_bounds = array<i64: 1, 1, 64>}, {transform_indices = @transform_15, window_bounds = array<i64: 2, 16, 64>}]} {
    %c0_i32 = arith.constant 0 : i32
    %0 = arith.cmpi eq, %arg1, %c0_i32 : i32
    %1 = arith.extui %0 : i1 to i32
    %c0_i32_0 = arith.constant 0 : i32
    %2 = arith.cmpi ne, %1, %c0_i32_0 : i32
    scf.if %2 {
      %c0_67 = arith.constant 0 : index
      %c0_68 = arith.constant 0 : index
      %c0_69 = arith.constant 0 : index
      %103 = vector.load %arg2[%c0_67, %c0_68, %c0_69] : memref<2x16x64xf32, #tpu.memory_space<vmem>>, vector<2x16x64xf32>
      %c0_70 = arith.constant 0 : index
      %c0_71 = arith.constant 0 : index
      %104 = vector.load %arg3[%c0_70, %c0_71] : memref<16x64xf32, #tpu.memory_space<vmem>>, vector<16x64xf32>
      %105 = vector.shape_cast %104 : vector<16x64xf32> to vector<1x16x64xf32>
      %106 = vector.broadcast %105 : vector<1x16x64xf32> to vector<2x16x64xf32>
      %107 = arith.addf %103, %106 : vector<2x16x64xf32>
      %c0_72 = arith.constant 0 : index
      %c0_73 = arith.constant 0 : index
      %c0_74 = arith.constant 0 : index
      %108 = vector.load %arg17[%c0_72, %c0_73, %c0_74] : memref<2x16x64xf32, #tpu.memory_space<vmem>>, vector<2x16x64xf32>
      tpu.vector_store %arg17[%c0_72, %c0_73, %c0_74], %107 {strides = array<i32>} : memref<2x16x64xf32, #tpu.memory_space<vmem>>, vector<2x16x64xf32>,
    } else {
    }
    %c0 = arith.constant 0 : index
    %c0_1 = arith.constant 0 : index
    %c0_2 = arith.constant 0 : index
    %3 = vector.load %arg17[%c0, %c0_1, %c0_2] : memref<2x16x64xf32, #tpu.memory_space<vmem>>, vector<2x16x64xf32>
    %4 = vector.shape_cast %3 : vector<2x16x64xf32> to vector<32x64xf32>
    %c0_3 = arith.constant 0 : index
    %c0_4 = arith.constant 0 : index
    %c0_5 = arith.constant 0 : index
    %5 = vector.load %arg9[%c0_3, %c0_4, %c0_5] : memref<1x1x64xf32, #tpu.memory_space<vmem>>, vector<1x1x64xf32>
    %6 = vector.shape_cast %5 : vector<1x1x64xf32> to vector<1x64xf32>
    %c0_6 = arith.constant 0 : index
    %c0_7 = arith.constant 0 : index
    %c0_8 = arith.constant 0 : index
    %7 = vector.load %arg10[%c0_6, %c0_7, %c0_8] : memref<1x1x64xf32, #tpu.memory_space<vmem>>, vector<1x1x64xf32>
    %8 = vector.shape_cast %7 : vector<1x1x64xf32> to vector<1x64xf32>
    %cst = arith.constant dense<0.000000e+00> : vector<32xf32>
    %9 = vector.multi_reduction <add>, %4, %cst [1] : vector<32x64xf32> to vector<32xf32>
    %10 = vector.shape_cast %9 : vector<32xf32> to vector<32x1xf32>
    %cst_9 = arith.constant 6.400000e+01 : f32
    %11 = vector.broadcast %cst_9 : f32 to vector<32x1xf32>
    %12 = arith.divf %10, %11 : vector<32x1xf32>
    %13 = vector.broadcast %12 : vector<32x1xf32> to vector<32x64xf32>
    %14 = arith.subf %4, %13 : vector<32x64xf32>
    %15 = arith.mulf %14, %14 : vector<32x64xf32>
    %cst_10 = arith.constant dense<0.000000e+00> : vector<32xf32>
    %16 = vector.multi_reduction <add>, %15, %cst_10 [1] : vector<32x64xf32> to vector<32xf32>
    %17 = vector.shape_cast %16 : vector<32xf32> to vector<32x1xf32>
    %cst_11 = arith.constant 6.400000e+01 : f32
    %18 = vector.broadcast %cst_11 : f32 to vector<32x1xf32>
    %19 = arith.divf %17, %18 : vector<32x1xf32>
    %cst_12 = arith.constant 9.99999974E-6 : f32
    %20 = vector.broadcast %cst_12 : f32 to vector<32x1xf32>
    %21 = arith.addf %19, %20 : vector<32x1xf32>
    %22 = math.rsqrt %21 : vector<32x1xf32>
    %23 = vector.broadcast %22 : vector<32x1xf32> to vector<32x64xf32>
    %24 = arith.mulf %14, %23 : vector<32x64xf32>
    %25 = vector.broadcast %6 : vector<1x64xf32> to vector<32x64xf32>
    %26 = arith.mulf %24, %25 : vector<32x64xf32>
    %27 = vector.broadcast %8 : vector<1x64xf32> to vector<32x64xf32>
    %28 = arith.addf %26, %27 : vector<32x64xf32>
    %29 = arith.truncf %28 : vector<32x64xf32> to vector<32x64xbf16>
    %c0_13 = arith.constant 0 : index
    %c0_14 = arith.constant 0 : index
    %c0_15 = arith.constant 0 : index
    %30 = vector.load %arg5[%c0_13, %c0_14, %c0_15] : memref<1x64x192xbf16, #tpu.memory_space<vmem>>, vector<1x64x192xbf16>
    %31 = vector.shape_cast %30 : vector<1x64x192xbf16> to vector<64x192xbf16>
    %cst_16 = arith.constant dense<0.000000e+00> : vector<32x192xf32>
    %32 = tpu.matmul %29, %31, %cst_16 {dimension_numbers = #tpu.dot_dimension_numbers<[1], [0], [0], [1], [0, 0, 1, 1], [], []>} : vector<32x64xbf16>, vector<64x192xbf16>, vector<32x192xf32> -> vector<32x192xf32>
    %c0_17 = arith.constant 0 : index
    %c0_18 = arith.constant 0 : index
    %c0_19 = arith.constant 0 : index
    %33 = vector.load %arg6[%c0_17, %c0_18, %c0_19] : memref<1x1x192xf32, #tpu.memory_space<vmem>>, vector<1x1x192xf32>
    %34 = vector.shape_cast %33 : vector<1x1x192xf32> to vector<1x192xf32>
    %35 = vector.broadcast %34 : vector<1x192xf32> to vector<32x192xf32>
    %36 = arith.addf %32, %35 : vector<32x192xf32>
    %37 = vector.shape_cast %36 : vector<32x192xf32> to vector<2x16x192xf32>
    %38 = arith.truncf %37 : vector<2x16x192xf32> to vector<2x16x192xbf16>
    %c0_20 = arith.constant 0 : index
    %c0_21 = arith.constant 0 : index
    %c0_22 = arith.constant 0 : index
    %39 = vector.load %arg18[%c0_20, %c0_21, %c0_22] : memref<2x16x192xbf16, #tpu.memory_space<vmem>>, vector<2x16x192xbf16>
    tpu.vector_store %arg18[%c0_20, %c0_21, %c0_22], %38 {strides = array<i32>} : memref<2x16x192xbf16, #tpu.memory_space<vmem>>, vector<2x16x192xbf16>,
    %c0_23 = arith.constant 0 : index
    %c0_24 = arith.constant 0 : index
    %40 = vector.load %arg4[%c0_23, %c0_24] : memref<16x16xf32, #tpu.memory_space<vmem>>, vector<16x16xf32>
    %c0_i32_25 = arith.constant 0 : i32
    %c2_i32 = arith.constant 2 : i32
    %41 = arith.addi %c0_i32_25, %c2_i32 : i32
    %c1_i32 = arith.constant 1 : i32
    scf.for %arg20 = %c0_i32_25 to %41 step %c1_i32  : i32 {
      %103 = arith.index_cast %arg20 : i32 to index
      %c0_67 = arith.constant 0 : index
      %c0_68 = arith.constant 0 : index
      %104 = vector.load %arg18[%103, %c0_67, %c0_68] : memref<2x16x192xbf16, #tpu.memory_space<vmem>>, vector<1x16x16xbf16>
      %105 = vector.shape_cast %104 : vector<1x16x16xbf16> to vector<16x16xbf16>
      %106 = arith.index_cast %arg20 : i32 to index
      %c0_69 = arith.constant 0 : index
      %c64 = arith.constant 64 : index
      %107 = vector.load %arg18[%106, %c0_69, %c64] : memref<2x16x192xbf16, #tpu.memory_space<vmem>>, vector<1x16x16xbf16>
      %108 = vector.shape_cast %107 : vector<1x16x16xbf16> to vector<16x16xbf16>
      %109 = arith.index_cast %arg20 : i32 to index
      %c0_70 = arith.constant 0 : index
      %c128 = arith.constant 128 : index
      %110 = vector.load %arg18[%109, %c0_70, %c128] : memref<2x16x192xbf16, #tpu.memory_space<vmem>>, vector<1x16x16xbf16>
      %111 = vector.shape_cast %110 : vector<1x16x16xbf16> to vector<16x16xbf16>
      %cst_71 = arith.constant dense<0.000000e+00> : vector<16x16xf32>
      %112 = tpu.matmul %105, %108, %cst_71 {dimension_numbers = #tpu.dot_dimension_numbers<[1], [1], [0], [0], [0, 0, 1, 0], [], []>} : vector<16x16xbf16>, vector<16x16xbf16>, vector<16x16xf32> -> vector<16x16xf32>
      %113 = arith.addf %112, %40 : vector<16x16xf32>
      %cst_72 = arith.constant dense<0xFF800000> : vector<16xf32>
      %114 = vector.multi_reduction <maximumf>, %113, %cst_72 [1] : vector<16x16xf32> to vector<16xf32>
      %115 = vector.shape_cast %114 : vector<16xf32> to vector<16x1xf32>
      %116 = vector.broadcast %115 : vector<16x1xf32> to vector<16x16xf32>
      %117 = arith.subf %113, %116 : vector<16x16xf32>
      %118 = math.exp %117 : vector<16x16xf32>
      %cst_73 = arith.constant dense<0.000000e+00> : vector<16xf32>
      %119 = vector.multi_reduction <add>, %118, %cst_73 [1] : vector<16x16xf32> to vector<16xf32>
      %120 = vector.shape_cast %119 : vector<16xf32> to vector<16x1xf32>
      %121 = tpu.reciprocal %120 {approx = true} : vector<16x1xf32> -> vector<16x1xf32>
      %122 = vector.broadcast %121 : vector<16x1xf32> to vector<16x16xf32>
      %123 = arith.mulf %118, %122 : vector<16x16xf32>
      %124 = arith.truncf %123 : vector<16x16xf32> to vector<16x16xbf16>
      %cst_74 = arith.constant dense<0.000000e+00> : vector<16x16xf32>
      %125 = tpu.matmul %124, %111, %cst_74 {dimension_numbers = #tpu.dot_dimension_numbers<[1], [0], [0], [1], [0, 0, 1, 1], [], []>} : vector<16x16xbf16>, vector<16x16xbf16>, vector<16x16xf32> -> vector<16x16xf32>
      %126 = arith.truncf %125 : vector<16x16xf32> to vector<16x16xbf16>
      %127 = arith.index_cast %arg20 : i32 to index
      %c0_75 = arith.constant 0 : index
      %c16 = arith.constant 16 : index
      %128 = vector.load %arg18[%127, %c0_75, %c16] : memref<2x16x192xbf16, #tpu.memory_space<vmem>>, vector<1x16x16xbf16>
      %129 = vector.shape_cast %128 : vector<1x16x16xbf16> to vector<16x16xbf16>
      %130 = arith.index_cast %arg20 : i32 to index
      %c0_76 = arith.constant 0 : index
      %c80 = arith.constant 80 : index
      %131 = vector.load %arg18[%130, %c0_76, %c80] : memref<2x16x192xbf16, #tpu.memory_space<vmem>>, vector<1x16x16xbf16>
      %132 = vector.shape_cast %131 : vector<1x16x16xbf16> to vector<16x16xbf16>
      %133 = arith.index_cast %arg20 : i32 to index
      %c0_77 = arith.constant 0 : index
      %c144 = arith.constant 144 : index
      %134 = vector.load %arg18[%133, %c0_77, %c144] : memref<2x16x192xbf16, #tpu.memory_space<vmem>>, vector<1x16x16xbf16>
      %135 = vector.shape_cast %134 : vector<1x16x16xbf16> to vector<16x16xbf16>
      %cst_78 = arith.constant dense<0.000000e+00> : vector<16x16xf32>
      %136 = tpu.matmul %129, %132, %cst_78 {dimension_numbers = #tpu.dot_dimension_numbers<[1], [1], [0], [0], [0, 0, 1, 0], [], []>} : vector<16x16xbf16>, vector<16x16xbf16>, vector<16x16xf32> -> vector<16x16xf32>
      %137 = arith.addf %136, %40 : vector<16x16xf32>
      %cst_79 = arith.constant dense<0xFF800000> : vector<16xf32>
      %138 = vector.multi_reduction <maximumf>, %137, %cst_79 [1] : vector<16x16xf32> to vector<16xf32>
      %139 = vector.shape_cast %138 : vector<16xf32> to vector<16x1xf32>
      %140 = vector.broadcast %139 : vector<16x1xf32> to vector<16x16xf32>
      %141 = arith.subf %137, %140 : vector<16x16xf32>
      %142 = math.exp %141 : vector<16x16xf32>
      %cst_80 = arith.constant dense<0.000000e+00> : vector<16xf32>
      %143 = vector.multi_reduction <add>, %142, %cst_80 [1] : vector<16x16xf32> to vector<16xf32>
      %144 = vector.shape_cast %143 : vector<16xf32> to vector<16x1xf32>
      %145 = tpu.reciprocal %144 {approx = true} : vector<16x1xf32> -> vector<16x1xf32>
      %146 = vector.broadcast %145 : vector<16x1xf32> to vector<16x16xf32>
      %147 = arith.mulf %142, %146 : vector<16x16xf32>
      %148 = arith.truncf %147 : vector<16x16xf32> to vector<16x16xbf16>
      %cst_81 = arith.constant dense<0.000000e+00> : vector<16x16xf32>
      %149 = tpu.matmul %148, %135, %cst_81 {dimension_numbers = #tpu.dot_dimension_numbers<[1], [0], [0], [1], [0, 0, 1, 1], [], []>} : vector<16x16xbf16>, vector<16x16xbf16>, vector<16x16xf32> -> vector<16x16xf32>
      %150 = arith.truncf %149 : vector<16x16xf32> to vector<16x16xbf16>
      %151 = arith.index_cast %arg20 : i32 to index
      %c0_82 = arith.constant 0 : index
      %c32 = arith.constant 32 : index
      %152 = vector.load %arg18[%151, %c0_82, %c32] : memref<2x16x192xbf16, #tpu.memory_space<vmem>>, vector<1x16x16xbf16>
      %153 = vector.shape_cast %152 : vector<1x16x16xbf16> to vector<16x16xbf16>
      %154 = arith.index_cast %arg20 : i32 to index
      %c0_83 = arith.constant 0 : index
      %c96 = arith.constant 96 : index
      %155 = vector.load %arg18[%154, %c0_83, %c96] : memref<2x16x192xbf16, #tpu.memory_space<vmem>>, vector<1x16x16xbf16>
      %156 = vector.shape_cast %155 : vector<1x16x16xbf16> to vector<16x16xbf16>
      %157 = arith.index_cast %arg20 : i32 to index
      %c0_84 = arith.constant 0 : index
      %c160 = arith.constant 160 : index
      %158 = vector.load %arg18[%157, %c0_84, %c160] : memref<2x16x192xbf16, #tpu.memory_space<vmem>>, vector<1x16x16xbf16>
      %159 = vector.shape_cast %158 : vector<1x16x16xbf16> to vector<16x16xbf16>
      %cst_85 = arith.constant dense<0.000000e+00> : vector<16x16xf32>
      %160 = tpu.matmul %153, %156, %cst_85 {dimension_numbers = #tpu.dot_dimension_numbers<[1], [1], [0], [0], [0, 0, 1, 0], [], []>} : vector<16x16xbf16>, vector<16x16xbf16>, vector<16x16xf32> -> vector<16x16xf32>
      %161 = arith.addf %160, %40 : vector<16x16xf32>
      %cst_86 = arith.constant dense<0xFF800000> : vector<16xf32>
      %162 = vector.multi_reduction <maximumf>, %161, %cst_86 [1] : vector<16x16xf32> to vector<16xf32>
      %163 = vector.shape_cast %162 : vector<16xf32> to vector<16x1xf32>
      %164 = vector.broadcast %163 : vector<16x1xf32> to vector<16x16xf32>
      %165 = arith.subf %161, %164 : vector<16x16xf32>
      %166 = math.exp %165 : vector<16x16xf32>
      %cst_87 = arith.constant dense<0.000000e+00> : vector<16xf32>
      %167 = vector.multi_reduction <add>, %166, %cst_87 [1] : vector<16x16xf32> to vector<16xf32>
      %168 = vector.shape_cast %167 : vector<16xf32> to vector<16x1xf32>
      %169 = tpu.reciprocal %168 {approx = true} : vector<16x1xf32> -> vector<16x1xf32>
      %170 = vector.broadcast %169 : vector<16x1xf32> to vector<16x16xf32>
      %171 = arith.mulf %166, %170 : vector<16x16xf32>
      %172 = arith.truncf %171 : vector<16x16xf32> to vector<16x16xbf16>
      %cst_88 = arith.constant dense<0.000000e+00> : vector<16x16xf32>
      %173 = tpu.matmul %172, %159, %cst_88 {dimension_numbers = #tpu.dot_dimension_numbers<[1], [0], [0], [1], [0, 0, 1, 1], [], []>} : vector<16x16xbf16>, vector<16x16xbf16>, vector<16x16xf32> -> vector<16x16xf32>
      %174 = arith.truncf %173 : vector<16x16xf32> to vector<16x16xbf16>
      %175 = arith.index_cast %arg20 : i32 to index
      %c0_89 = arith.constant 0 : index
      %c48 = arith.constant 48 : index
      %176 = vector.load %arg18[%175, %c0_89, %c48] : memref<2x16x192xbf16, #tpu.memory_space<vmem>>, vector<1x16x16xbf16>
      %177 = vector.shape_cast %176 : vector<1x16x16xbf16> to vector<16x16xbf16>
      %178 = arith.index_cast %arg20 : i32 to index
      %c0_90 = arith.constant 0 : index
      %c112 = arith.constant 112 : index
      %179 = vector.load %arg18[%178, %c0_90, %c112] : memref<2x16x192xbf16, #tpu.memory_space<vmem>>, vector<1x16x16xbf16>
      %180 = vector.shape_cast %179 : vector<1x16x16xbf16> to vector<16x16xbf16>
      %181 = arith.index_cast %arg20 : i32 to index
      %c0_91 = arith.constant 0 : index
      %c176 = arith.constant 176 : index
      %182 = vector.load %arg18[%181, %c0_91, %c176] : memref<2x16x192xbf16, #tpu.memory_space<vmem>>, vector<1x16x16xbf16>
      %183 = vector.shape_cast %182 : vector<1x16x16xbf16> to vector<16x16xbf16>
      %cst_92 = arith.constant dense<0.000000e+00> : vector<16x16xf32>
      %184 = tpu.matmul %177, %180, %cst_92 {dimension_numbers = #tpu.dot_dimension_numbers<[1], [1], [0], [0], [0, 0, 1, 0], [], []>} : vector<16x16xbf16>, vector<16x16xbf16>, vector<16x16xf32> -> vector<16x16xf32>
      %185 = arith.addf %184, %40 : vector<16x16xf32>
      %cst_93 = arith.constant dense<0xFF800000> : vector<16xf32>
      %186 = vector.multi_reduction <maximumf>, %185, %cst_93 [1] : vector<16x16xf32> to vector<16xf32>
      %187 = vector.shape_cast %186 : vector<16xf32> to vector<16x1xf32>
      %188 = vector.broadcast %187 : vector<16x1xf32> to vector<16x16xf32>
      %189 = arith.subf %185, %188 : vector<16x16xf32>
      %190 = math.exp %189 : vector<16x16xf32>
      %cst_94 = arith.constant dense<0.000000e+00> : vector<16xf32>
      %191 = vector.multi_reduction <add>, %190, %cst_94 [1] : vector<16x16xf32> to vector<16xf32>
      %192 = vector.shape_cast %191 : vector<16xf32> to vector<16x1xf32>
      %193 = tpu.reciprocal %192 {approx = true} : vector<16x1xf32> -> vector<16x1xf32>
      %194 = vector.broadcast %193 : vector<16x1xf32> to vector<16x16xf32>
      %195 = arith.mulf %190, %194 : vector<16x16xf32>
      %196 = arith.truncf %195 : vector<16x16xf32> to vector<16x16xbf16>
      %cst_95 = arith.constant dense<0.000000e+00> : vector<16x16xf32>
      %197 = tpu.matmul %196, %183, %cst_95 {dimension_numbers = #tpu.dot_dimension_numbers<[1], [0], [0], [1], [0, 0, 1, 1], [], []>} : vector<16x16xbf16>, vector<16x16xbf16>, vector<16x16xf32> -> vector<16x16xf32>
      %198 = arith.truncf %197 : vector<16x16xf32> to vector<16x16xbf16>
      %199 = tpu.concatenate %126, %150, %174, %198 in 1 : vector<16x16xbf16>, vector<16x16xbf16>, vector<16x16xbf16>, vector<16x16xbf16> -> vector<16x64xbf16>
      %200 = arith.index_cast %arg20 : i32 to index
      %c0_96 = arith.constant 0 : index
      %c0_97 = arith.constant 0 : index
      %201 = vector.load %arg19[%200, %c0_96, %c0_97] : memref<2x16x64xbf16, #tpu.memory_space<vmem>>, vector<1x16x64xbf16>
      %202 = vector.shape_cast %201 : vector<1x16x64xbf16> to vector<16x64xbf16>
      %203 = vector.shape_cast %199 : vector<16x64xbf16> to vector<1x16x64xbf16>
      tpu.vector_store %arg19[%200, %c0_96, %c0_97], %203 {strides = array<i32>} : memref<2x16x64xbf16, #tpu.memory_space<vmem>>, vector<1x16x64xbf16>,
    }
    %c2_i32_26 = arith.constant 2 : i32
    %c0_27 = arith.constant 0 : index
    %c0_28 = arith.constant 0 : index
    %c0_29 = arith.constant 0 : index
    %42 = vector.load %arg19[%c0_27, %c0_28, %c0_29] : memref<2x16x64xbf16, #tpu.memory_space<vmem>>, vector<2x16x64xbf16>
    %43 = vector.shape_cast %42 : vector<2x16x64xbf16> to vector<32x64xbf16>
    %c0_30 = arith.constant 0 : index
    %c0_31 = arith.constant 0 : index
    %c0_32 = arith.constant 0 : index
    %44 = vector.load %arg7[%c0_30, %c0_31, %c0_32] : memref<1x64x64xbf16, #tpu.memory_space<vmem>>, vector<1x64x64xbf16>
    %45 = vector.shape_cast %44 : vector<1x64x64xbf16> to vector<64x64xbf16>
    %cst_33 = arith.constant dense<0.000000e+00> : vector<32x64xf32>
    %46 = tpu.matmul %43, %45, %cst_33 {dimension_numbers = #tpu.dot_dimension_numbers<[1], [0], [0], [1], [0, 0, 1, 1], [], []>} : vector<32x64xbf16>, vector<64x64xbf16>, vector<32x64xf32> -> vector<32x64xf32>
    %47 = arith.addf %4, %46 : vector<32x64xf32>
    %c0_34 = arith.constant 0 : index
    %c0_35 = arith.constant 0 : index
    %c0_36 = arith.constant 0 : index
    %48 = vector.load %arg8[%c0_34, %c0_35, %c0_36] : memref<1x1x64xf32, #tpu.memory_space<vmem>>, vector<1x1x64xf32>
    %49 = vector.shape_cast %48 : vector<1x1x64xf32> to vector<1x64xf32>
    %50 = vector.broadcast %49 : vector<1x64xf32> to vector<32x64xf32>
    %51 = arith.addf %47, %50 : vector<32x64xf32>
    %c0_37 = arith.constant 0 : index
    %c0_38 = arith.constant 0 : index
    %c0_39 = arith.constant 0 : index
    %52 = vector.load %arg11[%c0_37, %c0_38, %c0_39] : memref<1x1x64xf32, #tpu.memory_space<vmem>>, vector<1x1x64xf32>
    %53 = vector.shape_cast %52 : vector<1x1x64xf32> to vector<1x64xf32>
    %c0_40 = arith.constant 0 : index
    %c0_41 = arith.constant 0 : index
    %c0_42 = arith.constant 0 : index
    %54 = vector.load %arg12[%c0_40, %c0_41, %c0_42] : memref<1x1x64xf32, #tpu.memory_space<vmem>>, vector<1x1x64xf32>
    %55 = vector.shape_cast %54 : vector<1x1x64xf32> to vector<1x64xf32>
    %cst_43 = arith.constant dense<0.000000e+00> : vector<32xf32>
    %56 = vector.multi_reduction <add>, %51, %cst_43 [1] : vector<32x64xf32> to vector<32xf32>
    %57 = vector.shape_cast %56 : vector<32xf32> to vector<32x1xf32>
    %cst_44 = arith.constant 6.400000e+01 : f32
    %58 = vector.broadcast %cst_44 : f32 to vector<32x1xf32>
    %59 = arith.divf %57, %58 : vector<32x1xf32>
    %60 = vector.broadcast %59 : vector<32x1xf32> to vector<32x64xf32>
    %61 = arith.subf %51, %60 : vector<32x64xf32>
    %62 = arith.mulf %61, %61 : vector<32x64xf32>
    %cst_45 = arith.constant dense<0.000000e+00> : vector<32xf32>
    %63 = vector.multi_reduction <add>, %62, %cst_45 [1] : vector<32x64xf32> to vector<32xf32>
    %64 = vector.shape_cast %63 : vector<32xf32> to vector<32x1xf32>
    %cst_46 = arith.constant 6.400000e+01 : f32
    %65 = vector.broadcast %cst_46 : f32 to vector<32x1xf32>
    %66 = arith.divf %64, %65 : vector<32x1xf32>
    %cst_47 = arith.constant 9.99999974E-6 : f32
    %67 = vector.broadcast %cst_47 : f32 to vector<32x1xf32>
    %68 = arith.addf %66, %67 : vector<32x1xf32>
    %69 = math.rsqrt %68 : vector<32x1xf32>
    %70 = vector.broadcast %69 : vector<32x1xf32> to vector<32x64xf32>
    %71 = arith.mulf %61, %70 : vector<32x64xf32>
    %72 = vector.broadcast %53 : vector<1x64xf32> to vector<32x64xf32>
    %73 = arith.mulf %71, %72 : vector<32x64xf32>
    %74 = vector.broadcast %55 : vector<1x64xf32> to vector<32x64xf32>
    %75 = arith.addf %73, %74 : vector<32x64xf32>
    %76 = arith.truncf %75 : vector<32x64xf32> to vector<32x64xbf16>
    %c0_48 = arith.constant 0 : index
    %c0_49 = arith.constant 0 : index
    %c0_50 = arith.constant 0 : index
    %77 = vector.load %arg13[%c0_48, %c0_49, %c0_50] : memref<1x64x256xbf16, #tpu.memory_space<vmem>>, vector<1x64x256xbf16>
    %78 = vector.shape_cast %77 : vector<1x64x256xbf16> to vector<64x256xbf16>
    %cst_51 = arith.constant dense<0.000000e+00> : vector<32x256xf32>
    %79 = tpu.matmul %76, %78, %cst_51 {dimension_numbers = #tpu.dot_dimension_numbers<[1], [0], [0], [1], [0, 0, 1, 1], [], []>} : vector<32x64xbf16>, vector<64x256xbf16>, vector<32x256xf32> -> vector<32x256xf32>
    %c0_52 = arith.constant 0 : index
    %c0_53 = arith.constant 0 : index
    %c0_54 = arith.constant 0 : index
    %80 = vector.load %arg14[%c0_52, %c0_53, %c0_54] : memref<1x1x256xf32, #tpu.memory_space<vmem>>, vector<1x1x256xf32>
    %81 = vector.shape_cast %80 : vector<1x1x256xf32> to vector<1x256xf32>
    %82 = vector.broadcast %81 : vector<1x256xf32> to vector<32x256xf32>
    %83 = arith.addf %79, %82 : vector<32x256xf32>
    %cst_55 = arith.constant 1.702000e+00 : f32
    %84 = vector.broadcast %cst_55 : f32 to vector<32x256xf32>
    %85 = arith.mulf %84, %83 : vector<32x256xf32>
    %86 = arith.negf %85 : vector<32x256xf32>
    %87 = math.exp %86 : vector<32x256xf32>
    %cst_56 = arith.constant 1.000000e+00 : f32
    %88 = vector.broadcast %cst_56 : f32 to vector<32x256xf32>
    %89 = arith.addf %88, %87 : vector<32x256xf32>
    %90 = arith.divf %88, %89 : vector<32x256xf32>
    %91 = arith.mulf %83, %90 : vector<32x256xf32>
    %92 = arith.truncf %91 : vector<32x256xf32> to vector<32x256xbf16>
    %c0_57 = arith.constant 0 : index
    %c0_58 = arith.constant 0 : index
    %c0_59 = arith.constant 0 : index
    %93 = vector.load %arg15[%c0_57, %c0_58, %c0_59] : memref<1x256x64xbf16, #tpu.memory_space<vmem>>, vector<1x256x64xbf16>
    %94 = vector.shape_cast %93 : vector<1x256x64xbf16> to vector<256x64xbf16>
    %cst_60 = arith.constant dense<0.000000e+00> : vector<32x64xf32>
    %95 = tpu.matmul %92, %94, %cst_60 {dimension_numbers = #tpu.dot_dimension_numbers<[1], [0], [0], [1], [0, 0, 1, 1], [], []>} : vector<32x256xbf16>, vector<256x64xbf16>, vector<32x64xf32> -> vector<32x64xf32>
    %c0_61 = arith.constant 0 : index
    %c0_62 = arith.constant 0 : index
    %c0_63 = arith.constant 0 : index
    %96 = vector.load %arg16[%c0_61, %c0_62, %c0_63] : memref<1x1x64xf32, #tpu.memory_space<vmem>>, vector<1x1x64xf32>
    %97 = vector.shape_cast %96 : vector<1x1x64xf32> to vector<1x64xf32>
    %98 = vector.broadcast %97 : vector<1x64xf32> to vector<32x64xf32>
    %99 = arith.addf %95, %98 : vector<32x64xf32>
    %100 = arith.addf %51, %99 : vector<32x64xf32>
    %101 = vector.shape_cast %100 : vector<32x64xf32> to vector<2x16x64xf32>
    %c0_64 = arith.constant 0 : index
    %c0_65 = arith.constant 0 : index
    %c0_66 = arith.constant 0 : index
    %102 = vector.load %arg17[%c0_64, %c0_65, %c0_66] : memref<2x16x64xf32, #tpu.memory_space<vmem>>, vector<2x16x64xf32>
    tpu.vector_store %arg17[%c0_64, %c0_65, %c0_66], %101 {strides = array<i32>} : memref<2x16x64xf32, #tpu.memory_space<vmem>>, vector<2x16x64xf32>,
    return
  }
  func.func @transform_0(%arg0: i32, %arg1: i32) -> (i32, i32, i32) {
    %c0_i32 = arith.constant 0 : i32
    %c0_i32_0 = arith.constant 0 : i32
    %c0_i32_1 = arith.constant 0 : i32
    return %arg0, %c0_i32, %c0_i32_0 : i32, i32, i32
  }
  func.func @transform_1(%arg0: i32, %arg1: i32) -> (i32, i32) {
    %c0_i32 = arith.constant 0 : i32
    %c0_i32_0 = arith.constant 0 : i32
    %c0_i32_1 = arith.constant 0 : i32
    return %c0_i32, %c0_i32_0 : i32, i32
  }
  func.func @transform_2(%arg0: i32, %arg1: i32) -> (i32, i32) {
    %c0_i32 = arith.constant 0 : i32
    %c0_i32_0 = arith.constant 0 : i32
    %c0_i32_1 = arith.constant 0 : i32
    return %c0_i32, %c0_i32_0 : i32, i32
  }
  func.func @transform_3(%arg0: i32, %arg1: i32) -> (i32, i32, i32) {
    %c0_i32 = arith.constant 0 : i32
    %c0_i32_0 = arith.constant 0 : i32
    %c0_i32_1 = arith.constant 0 : i32
    return %arg1, %c0_i32, %c0_i32_0 : i32, i32, i32
  }
  func.func @transform_4(%arg0: i32, %arg1: i32) -> (i32, i32, i32) {
    %c0_i32 = arith.constant 0 : i32
    %c0_i32_0 = arith.constant 0 : i32
    %c0_i32_1 = arith.constant 0 : i32
    return %arg1, %c0_i32, %c0_i32_0 : i32, i32, i32
  }
  func.func @transform_5(%arg0: i32, %arg1: i32) -> (i32, i32, i32) {
    %c0_i32 = arith.constant 0 : i32
    %c0_i32_0 = arith.constant 0 : i32
    %c0_i32_1 = arith.constant 0 : i32
    return %arg1, %c0_i32, %c0_i32_0 : i32, i32, i32
  }
  func.func @transform_6(%arg0: i32, %arg1: i32) -> (i32, i32, i32) {
    %c0_i32 = arith.constant 0 : i32
    %c0_i32_0 = arith.constant 0 : i32
    %c0_i32_1 = arith.constant 0 : i32
    return %arg1, %c0_i32, %c0_i32_0 : i32, i32, i32
  }
  func.func @transform_7(%arg0: i32, %arg1: i32) -> (i32, i32, i32) {
    %c0_i32 = arith.constant 0 : i32
    %c0_i32_0 = arith.constant 0 : i32
    %c0_i32_1 = arith.constant 0 : i32
    return %arg1, %c0_i32, %c0_i32_0 : i32, i32, i32
  }
  func.func @transform_8(%arg0: i32, %arg1: i32) -> (i32, i32, i32) {
    %c0_i32 = arith.constant 0 : i32
    %c0_i32_0 = arith.constant 0 : i32
    %c0_i32_1 = arith.constant 0 : i32
    return %arg1, %c0_i32, %c0_i32_0 : i32, i32, i32
  }
  func.func @transform_9(%arg0: i32, %arg1: i32) -> (i32, i32, i32) {
    %c0_i32 = arith.constant 0 : i32
    %c0_i32_0 = arith.constant 0 : i32
    %c0_i32_1 = arith.constant 0 : i32
    return %arg1, %c0_i32, %c0_i32_0 : i32, i32, i32
  }
  func.func @transform_10(%arg0: i32, %arg1: i32) -> (i32, i32, i32) {
    %c0_i32 = arith.constant 0 : i32
    %c0_i32_0 = arith.constant 0 : i32
    %c0_i32_1 = arith.constant 0 : i32
    return %arg1, %c0_i32, %c0_i32_0 : i32, i32, i32
  }
  func.func @transform_11(%arg0: i32, %arg1: i32) -> (i32, i32, i32) {
    %c0_i32 = arith.constant 0 : i32
    %c0_i32_0 = arith.constant 0 : i32
    %c0_i32_1 = arith.constant 0 : i32
    return %arg1, %c0_i32, %c0_i32_0 : i32, i32, i32
  }
  func.func @transform_12(%arg0: i32, %arg1: i32) -> (i32, i32, i32) {
    %c0_i32 = arith.constant 0 : i32
    %c0_i32_0 = arith.constant 0 : i32
    %c0_i32_1 = arith.constant 0 : i32
    return %arg1, %c0_i32, %c0_i32_0 : i32, i32, i32
  }
  func.func @transform_13(%arg0: i32, %arg1: i32) -> (i32, i32, i32) {
    %c0_i32 = arith.constant 0 : i32
    %c0_i32_0 = arith.constant 0 : i32
    %c0_i32_1 = arith.constant 0 : i32
    return %arg1, %c0_i32, %c0_i32_0 : i32, i32, i32
  }
  func.func @transform_14(%arg0: i32, %arg1: i32) -> (i32, i32, i32) {
    %c0_i32 = arith.constant 0 : i32
    %c0_i32_0 = arith.constant 0 : i32
    %c0_i32_1 = arith.constant 0 : i32
    return %arg1, %c0_i32, %c0_i32_0 : i32, i32, i32
  }
  func.func @transform_15(%arg0: i32, %arg1: i32) -> (i32, i32, i32) {
    %c0_i32 = arith.constant 0 : i32
    %c0_i32_0 = arith.constant 0 : i32
    %c0_i32_1 = arith.constant 0 : i32
    return %arg0, %c0_i32, %c0_i32_0 : i32, i32, i32
  }
}

</mosaic_0001>

<llo_original>
// kernel: tpu_custom_call.1
$region0: #{tpu_custom_call.1}
  #allocation0 [shape = 'u32[]', space=smem, size = 0x4, offset = 0x4, fixed_abs, tag = 'smem constant byte address 0x4 - core index']
  #allocation1 [shape = 'u32[144,128]{1,0:T(1,128)}', space=vmem, size = 0x12000, scoped, tag = 'internal scratch']
  #allocation2 [shape = 'bf16[2,16,192]{2,1,0:T(8,128)(2,1)}', space=vmem, size = 0x4000, scoped, tag = 'scratch operand']
  #allocation3 [shape = 'bf16[2,16,64]{2,1,0:T(8,128)(2,1)}', space=vmem, size = 0x2000, scoped, tag = 'scratch operand']
  %s0 = inlined_call_operand.vmem [shape: f32[4,16,64], index: 0, kind: input, shape index: {}]
  %s1 = inlined_call_operand.vmem [shape: f32[16,64], index: 1, kind: input, shape index: {}]
  %s2 = inlined_call_operand.vmem [shape: f32[16,16], index: 2, kind: input, shape index: {}]
  %s3 = inlined_call_operand.vmem [shape: bf16[3,64,192], index: 3, kind: input, shape index: {}]
  %s4 = inlined_call_operand.vmem [shape: f32[3,1,192], index: 4, kind: input, shape index: {}]
  %s5 = inlined_call_operand.vmem [shape: bf16[3,64,64], index: 5, kind: input, shape index: {}]
  %s6 = inlined_call_operand.hbm [shape: f32[3,1,64], index: 6, kind: input, shape index: {}]
  %s7 = inlined_call_operand.hbm [shape: f32[3,1,64], index: 7, kind: input, shape index: {}]
  %s8 = inlined_call_operand.hbm [shape: f32[3,1,64], index: 8, kind: input, shape index: {}]
  %s9 = inlined_call_operand.hbm [shape: f32[3,1,64], index: 9, kind: input, shape index: {}]
  %s10 = inlined_call_operand.hbm [shape: f32[3,1,64], index: 10, kind: input, shape index: {}]
  %s11 = inlined_call_operand.vmem [shape: bf16[3,64,256], index: 11, kind: input, shape index: {}]
  %s12 = inlined_call_operand.vmem [shape: f32[3,1,256], index: 12, kind: input, shape index: {}]
  %s13 = inlined_call_operand.vmem [shape: bf16[3,256,64], index: 13, kind: input, shape index: {}]
  %s14 = inlined_call_operand.vmem [shape: f32[3,1,64], index: 14, kind: input, shape index: {}]
  %s15 = inlined_call_operand.hbm [shape: f32[4,16,64], index: 15, kind: output, shape index: {}]
  %s16 = sld [smem:[#allocation0]]
  $region124: #{tpu_custom_call.1} parent=0
    _
  %s18 = ssub.s32 1, %s16
  %s19 = scalar_select 0, %s18, %s16
  $region1: #{tpu_custom_call.1} parent=0
    #allocation4 [shape = 'u8[1024]{0}', space=vmem, size = 0x400, scoped, tag = 'input window, operand 6']
    #allocation5 [shape = 's32[2]{0}', space=sflag, size = 0x8, scoped, tag = 'scoped memory for tpu_custom_call.1']
    #allocation6 [shape = 's32[2]{0}', space=sflag, size = 0x8, scoped, tag = 'scoped memory for tpu_custom_call.1']
    #allocation7 [shape = 'u8[1024]{0}', space=vmem, size = 0x400, scoped, tag = 'input window, operand 7']
    #allocation8 [shape = 's32[2]{0}', space=sflag, size = 0x8, scoped, tag = 'scoped memory for tpu_custom_call.1']
    #allocation9 [shape = 'u8[1024]{0}', space=vmem, size = 0x400, scoped, tag = 'input window, operand 8']
    #allocation10 [shape = 'u8[1024]{0}', space=vmem, size = 0x400, scoped, tag = 'input window, operand 9']
    #allocation11 [shape = 's32[2]{0}', space=sflag, size = 0x8, scoped, tag = 'scoped memory for tpu_custom_call.1']
    #allocation12 [shape = 'u8[1024]{0}', space=vmem, size = 0x400, scoped, tag = 'input window, operand 10']
    #allocation13 [shape = 'u8[32768]{0}', space=vmem, size = 0x8000, scoped, tag = 'output window, operand 0']
    %20 = vsyncpa [#allocation5], 0
    %s21 = scalar_lea.sflag [#allocation5], 1
    %22 = vsyncpa %s21, 0
    %23 = vsyncpa [#allocation8], 0
    %s24 = scalar_lea.sflag [#allocation8], 1
    %25 = vsyncpa %s24, 0
    %26 = vsyncpa [#allocation11], 0
    %s27 = scalar_lea.sflag [#allocation11], 1
    %28 = vsyncpa %s27, 0
    %29 = vsyncpa [#allocation6], 0
    %s30 = scalar_lea.sflag [#allocation6], 1
    %31 = vsyncpa %s30, 0
    loop: start=0, step=1, limit=8
    $region2: #{tpu_custom_call.1} parent=1 // loop_pre_header
      _
    $region3: #{tpu_custom_call.1} parent=1 // loop_header
      %s33 = sphi 0, %s37
      %p34 = scmp.ge.s32.totalorder %s33, 8
      %s40 = sphi 0, %s52
      %s41 = sphi 0, %s48
      %s42 = sphi 0, %s40
      %s43 = sphi 0, %s41
      %s44 = sphi 0, %s42
      %s45 = sphi 0, %s43
      %s55 = sphi 0, %s57
      %s58 = sphi 0, %s55
      %s59 = sphi 0, %s58
      %s75 = sphi 0, %s59
      %s79 = sphi 0, %s79
      %s81 = sphi 0, %s79
      %s82 = sphi 0, %s81
      %s96 = sphi 0, %s82
      %s100 = sphi 0, %s100
      %s102 = sphi 0, %s100
      %s103 = sphi 0, %s102
      %s117 = sphi 0, %s103
      %s123 = sphi 0, %s125
      %s126 = sphi 0, %s123
      %s127 = sphi 0, %s126
      %s143 = sphi 0, %s127
      %s149 = sphi 0, %s151
      %s152 = sphi 0, %s149
      %s153 = sphi 0, %s152
      %s169 = sphi 0, %s153
      %s175 = sphi 0, %s177
      %s178 = sphi 0, %s175
      %s179 = sphi 0, %s178
      %s195 = sphi 0, %s179
      %s201 = sphi 0, %s203
      %s204 = sphi 0, %s201
      %s205 = sphi 0, %s204
      %s221 = sphi 0, %s205
      %s227 = sphi 0, %s229
      %s230 = sphi 0, %s227
      %s231 = sphi 0, %s230
      %s247 = sphi 0, %s231
      %s253 = sphi 0, %s255
      %s256 = sphi 0, %s253
      %s257 = sphi 0, %s256
      %s273 = sphi 0, %s257
      %s279 = sphi 0, %s281
      %s282 = sphi 0, %s279
      %s283 = sphi 0, %s282
      %s299 = sphi 0, %s283
      %s305 = sphi 0, %s307
      %s308 = sphi 0, %s305
      %s309 = sphi 0, %s308
      %s325 = sphi 0, %s309
      %s331 = sphi 0, %s333
      %s334 = sphi 0, %s331
      %s335 = sphi 0, %s334
      %s351 = sphi 0, %s335
      %s357 = sphi 0, %s359
      %s360 = sphi 0, %s357
      %s361 = sphi 0, %s360
      %s377 = sphi 0, %s361
      %s383 = sphi 0, %s385
      %s386 = sphi 0, %s383
      %s387 = sphi 0, %s386
      %s403 = sphi 0, %s387
      %s409 = sphi 0, %s411
      %s412 = sphi 0, %s409
      %s413 = sphi 0, %s412
      %s429 = sphi 0, %s413
      %s435 = sphi 0, %s437
      %s438 = sphi 0, %s435
      %s439 = sphi 0, %s438
      %s455 = sphi 0, %s439
    $region4: #{tpu_custom_call.1} parent=1 // loop_header_branch
      %36 = sbr.rel (%p34) target = $region8
    $region5: #{tpu_custom_call.1} parent=1 // loop_body
      %s38 = ssub.s32 %s33, 1
      %s39 = ssub.s32 %s33, 2
      %s46 = sadd.s32 1, %s41
      %p47 = scmp.ge.s32.totalorder %s46, 3
      %s48 = scalar_select %p47, 0, %s46
      %s49 = sadd.s32 1, %s40
      %s50 = scalar_select %p47, %s49, %s40
      %p51 = scmp.ge.s32.totalorder %s50, 2
      %s52 = scalar_select %p51, 0, %s50
      %s53 = ssub.s32 %s40, %s52
      %p54 = scmp.eq.s32.totalorder %s53, 0
      %s56 = sadd.s32 %s55, 1
      %s57 = scalar_select %p54, %s55, %s56
      %p60 = pneg %p54
      %p61 = scmp.eq.s32.totalorder %s33, 5
      %p62 = por %p60, %p61
      %p63 = scmp.ne.s32.totalorder %s55, %s58
      %p64 = scmp.eq.s32.totalorder %s33, 0
      %p65 = por %p63, %p64
      %p66 = scmp.ne.s32.totalorder %s55, %s58
      %p67 = scmp.eq.s32.totalorder %s38, 5
      %p68 = por %p66, %p67
      %p69 = scmp.ne.s32.totalorder %s58, %s59
      %p70 = scmp.eq.s32.totalorder %s38, 0
      %p71 = por %p69, %p70
      %p72 = scmp.ne.s32.totalorder %s58, %s59
      %p73 = scmp.eq.s32.totalorder %s39, 5
      %p74 = por %p72, %p73
      %p76 = scmp.ne.s32.totalorder %s59, %s75
      %p77 = scmp.eq.s32.totalorder %s39, 0
      %p78 = por %p76, %p77
      %s80 = sadd.s32 %s79, 1
      %p83 = scmp.eq.s32.totalorder %s33, 5
      %p84 = scmp.ne.s32.totalorder %s79, %s81
      %p85 = scmp.eq.s32.totalorder %s33, 0
      %p86 = por %p84, %p85
      %p87 = scmp.ne.s32.totalorder %s79, %s81
      %p88 = scmp.eq.s32.totalorder %s38, 5
      %p89 = por %p87, %p88
      %p90 = scmp.ne.s32.totalorder %s81, %s82
      %p91 = scmp.eq.s32.totalorder %s38, 0
      %p92 = por %p90, %p91
      %p93 = scmp.ne.s32.totalorder %s81, %s82
      %p94 = scmp.eq.s32.totalorder %s39, 5
      %p95 = por %p93, %p94
      %p97 = scmp.ne.s32.totalorder %s82, %s96
      %p98 = scmp.eq.s32.totalorder %s39, 0
      %p99 = por %p97, %p98
      %s101 = sadd.s32 %s100, 1
      %p104 = scmp.eq.s32.totalorder %s33, 5
      %p105 = scmp.ne.s32.totalorder %s100, %s102
      %p106 = scmp.eq.s32.totalorder %s33, 0
      %p107 = por %p105, %p106
      %p108 = scmp.ne.s32.totalorder %s100, %s102
      %p109 = scmp.eq.s32.totalorder %s38, 5
      %p110 = por %p108, %p109
      %p111 = scmp.ne.s32.totalorder %s102, %s103
      %p112 = scmp.eq.s32.totalorder %s38, 0
      %p113 = por %p111, %p112
      %p114 = scmp.ne.s32.totalorder %s102, %s103
      %p115 = scmp.eq.s32.totalorder %s39, 5
      %p116 = por %p114, %p115
      %p118 = scmp.ne.s32.totalorder %s103, %s117
      %p119 = scmp.eq.s32.totalorder %s39, 0
      %p120 = por %p118, %p119
      %s121 = ssub.s32 %s41, %s48
      %p122 = scmp.eq.s32.totalorder %s121, 0
      %s124 = sadd.s32 %s123, 1
      %s125 = scalar_select %p122, %s123, %s124
      %p128 = pneg %p122
      %p129 = scmp.eq.s32.totalorder %s33, 5
      %p130 = por %p128, %p129
      %p131 = scmp.ne.s32.totalorder %s123, %s126
      %p132 = scmp.eq.s32.totalorder %s33, 0
      %p133 = por %p131, %p132
      %p134 = scmp.ne.s32.totalorder %s123, %s126
      %p135 = scmp.eq.s32.totalorder %s38, 5
      %p136 = por %p134, %p135
      %p137 = scmp.ne.s32.totalorder %s126, %s127
      %p138 = scmp.eq.s32.totalorder %s38, 0
      %p139 = por %p137, %p138
      %p140 = scmp.ne.s32.totalorder %s126, %s127
      %p141 = scmp.eq.s32.totalorder %s39, 5
      %p142 = por %p140, %p141
      %p144 = scmp.ne.s32.totalorder %s127, %s143
      %p145 = scmp.eq.s32.totalorder %s39, 0
      %p146 = por %p144, %p145
      %s147 = ssub.s32 %s41, %s48
      %p148 = scmp.eq.s32.totalorder %s147, 0
      %s150 = sadd.s32 %s149, 1
      %s151 = scalar_select %p148, %s149, %s150
      %p154 = pneg %p148
      %p155 = scmp.eq.s32.totalorder %s33, 5
      %p156 = por %p154, %p155
      %p157 = scmp.ne.s32.totalorder %s149, %s152
      %p158 = scmp.eq.s32.totalorder %s33, 0
      %p159 = por %p157, %p158
      %p160 = scmp.ne.s32.totalorder %s149, %s152
      %p161 = scmp.eq.s32.totalorder %s38, 5
      %p162 = por %p160, %p161
      %p163 = scmp.ne.s32.totalorder %s152, %s153
      %p164 = scmp.eq.s32.totalorder %s38, 0
      %p165 = por %p163, %p164
      %p166 = scmp.ne.s32.totalorder %s152, %s153
      %p167 = scmp.eq.s32.totalorder %s39, 5
      %p168 = por %p166, %p167
      %p170 = scmp.ne.s32.totalorder %s153, %s169
      %p171 = scmp.eq.s32.totalorder %s39, 0
      %p172 = por %p170, %p171
      %s173 = ssub.s32 %s41, %s48
      %p174 = scmp.eq.s32.totalorder %s173, 0
      %s176 = sadd.s32 %s175, 1
      %s177 = scalar_select %p174, %s175, %s176
      %p180 = pneg %p174
      %p181 = scmp.eq.s32.totalorder %s33, 5
      %p182 = por %p180, %p181
      %p183 = scmp.ne.s32.totalorder %s175, %s178
      %p184 = scmp.eq.s32.totalorder %s33, 0
      %p185 = por %p183, %p184
      %p186 = scmp.ne.s32.totalorder %s175, %s178
      %p187 = scmp.eq.s32.totalorder %s38, 5
      %p188 = por %p186, %p187
      %p189 = scmp.ne.s32.totalorder %s178, %s179
      %p190 = scmp.eq.s32.totalorder %s38, 0
      %p191 = por %p189, %p190
      %p192 = scmp.ne.s32.totalorder %s178, %s179
      %p193 = scmp.eq.s32.totalorder %s39, 5
      %p194 = por %p192, %p193
      %p196 = scmp.ne.s32.totalorder %s179, %s195
      %p197 = scmp.eq.s32.totalorder %s39, 0
      %p198 = por %p196, %p197
      %s199 = ssub.s32 %s41, %s48
      %p200 = scmp.eq.s32.totalorder %s199, 0
      %s202 = sadd.s32 %s201, 1
      %s203 = scalar_select %p200, %s201, %s202
      %p206 = pneg %p200
      %p207 = scmp.eq.s32.totalorder %s33, 5
      %p208 = por %p206, %p207
      %p209 = scmp.ne.s32.totalorder %s201, %s204
      %p210 = scmp.eq.s32.totalorder %s33, 0
      %p211 = por %p209, %p210
      %p212 = scmp.ne.s32.totalorder %s201, %s204
      %p213 = scmp.eq.s32.totalorder %s38, 5
      %p214 = por %p212, %p213
      %p215 = scmp.ne.s32.totalorder %s204, %s205
      %p216 = scmp.eq.s32.totalorder %s38, 0
      %p217 = por %p215, %p216
      %p218 = scmp.ne.s32.totalorder %s204, %s205
      %p219 = scmp.eq.s32.totalorder %s39, 5
      %p220 = por %p218, %p219
      %p222 = scmp.ne.s32.totalorder %s205, %s221
      %p223 = scmp.eq.s32.totalorder %s39, 0
      %p224 = por %p222, %p223
      %s225 = ssub.s32 %s41, %s48
      %p226 = scmp.eq.s32.totalorder %s225, 0
      %s228 = sadd.s32 %s227, 1
      %s229 = scalar_select %p226, %s227, %s228
      %p232 = pneg %p226
      %p233 = scmp.eq.s32.totalorder %s33, 5
      %p234 = por %p232, %p233
      %p235 = scmp.ne.s32.totalorder %s227, %s230
      %p236 = scmp.eq.s32.totalorder %s33, 0
      %p237 = por %p235, %p236
      %p238 = scmp.ne.s32.totalorder %s227, %s230
      %p239 = scmp.eq.s32.totalorder %s38, 5
      %p240 = por %p238, %p239
      %p241 = scmp.ne.s32.totalorder %s230, %s231
      %p242 = scmp.eq.s32.totalorder %s38, 0
      %p243 = por %p241, %p242
      %p244 = scmp.ne.s32.totalorder %s230, %s231
      %p245 = scmp.eq.s32.totalorder %s39, 5
      %p246 = por %p244, %p245
      %p248 = scmp.ne.s32.totalorder %s231, %s247
      %p249 = scmp.eq.s32.totalorder %s39, 0
      %p250 = por %p248, %p249
      %s251 = ssub.s32 %s41, %s48
      %p252 = scmp.eq.s32.totalorder %s251, 0
      %s254 = sadd.s32 %s253, 1
      %s255 = scalar_select %p252, %s253, %s254
      %p258 = pneg %p252
      %p259 = scmp.eq.s32.totalorder %s33, 5
      %p260 = por %p258, %p259
      %p261 = scmp.ne.s32.totalorder %s253, %s256
      %p262 = scmp.eq.s32.totalorder %s33, 0
      %p263 = por %p261, %p262
      %p264 = scmp.ne.s32.totalorder %s253, %s256
      %p265 = scmp.eq.s32.totalorder %s38, 5
      %p266 = por %p264, %p265
      %p267 = scmp.ne.s32.totalorder %s256, %s257
      %p268 = scmp.eq.s32.totalorder %s38, 0
      %p269 = por %p267, %p268
      %p270 = scmp.ne.s32.totalorder %s256, %s257
      %p271 = scmp.eq.s32.totalorder %s39, 5
      %p272 = por %p270, %p271
      %p274 = scmp.ne.s32.totalorder %s257, %s273
      %p275 = scmp.eq.s32.totalorder %s39, 0
      %p276 = por %p274, %p275
      %s277 = ssub.s32 %s41, %s48
      %p278 = scmp.eq.s32.totalorder %s277, 0
      %s280 = sadd.s32 %s279, 1
      %s281 = scalar_select %p278, %s279, %s280
      %p284 = pneg %p278
      %p285 = scmp.eq.s32.totalorder %s33, 5
      %p286 = por %p284, %p285
      %p287 = scmp.ne.s32.totalorder %s279, %s282
      %p288 = scmp.eq.s32.totalorder %s33, 0
      %p289 = por %p287, %p288
      %p290 = scmp.ne.s32.totalorder %s279, %s282
      %p291 = scmp.eq.s32.totalorder %s38, 5
      %p292 = por %p290, %p291
      %p293 = scmp.ne.s32.totalorder %s282, %s283
      %p294 = scmp.eq.s32.totalorder %s38, 0
      %p295 = por %p293, %p294
      %p296 = scmp.ne.s32.totalorder %s282, %s283
      %p297 = scmp.eq.s32.totalorder %s39, 5
      %p298 = por %p296, %p297
      %p300 = scmp.ne.s32.totalorder %s283, %s299
      %p301 = scmp.eq.s32.totalorder %s39, 0
      %p302 = por %p300, %p301
      %s303 = ssub.s32 %s41, %s48
      %p304 = scmp.eq.s32.totalorder %s303, 0
      %s306 = sadd.s32 %s305, 1
      %s307 = scalar_select %p304, %s305, %s306
      %p310 = pneg %p304
      %p311 = scmp.eq.s32.totalorder %s33, 5
      %p312 = por %p310, %p311
      %p313 = scmp.ne.s32.totalorder %s305, %s308
      %p314 = scmp.eq.s32.totalorder %s33, 0
      %p315 = por %p313, %p314
      %p316 = scmp.ne.s32.totalorder %s305, %s308
      %p317 = scmp.eq.s32.totalorder %s38, 5
      %p318 = por %p316, %p317
      %p319 = scmp.ne.s32.totalorder %s308, %s309
      %p320 = scmp.eq.s32.totalorder %s38, 0
      %p321 = por %p319, %p320
      %p322 = scmp.ne.s32.totalorder %s308, %s309
      %p323 = scmp.eq.s32.totalorder %s39, 5
      %p324 = por %p322, %p323
      %p326 = scmp.ne.s32.totalorder %s309, %s325
      %p327 = scmp.eq.s32.totalorder %s39, 0
      %p328 = por %p326, %p327
      %s329 = ssub.s32 %s41, %s48
      %p330 = scmp.eq.s32.totalorder %s329, 0
      %s332 = sadd.s32 %s331, 1
      %s333 = scalar_select %p330, %s331, %s332
      %p336 = pneg %p330
      %p337 = scmp.eq.s32.totalorder %s33, 5
      %p338 = por %p336, %p337
      %p339 = scmp.ne.s32.totalorder %s331, %s334
      %p340 = scmp.eq.s32.totalorder %s33, 0
      %p341 = por %p339, %p340
      %p342 = scmp.ne.s32.totalorder %s331, %s334
      %p343 = scmp.eq.s32.totalorder %s38, 5
      %p344 = por %p342, %p343
      %p345 = scmp.ne.s32.totalorder %s334, %s335
      %p346 = scmp.eq.s32.totalorder %s38, 0
      %p347 = por %p345, %p346
      %p348 = scmp.ne.s32.totalorder %s334, %s335
      %p349 = scmp.eq.s32.totalorder %s39, 5
      %p350 = por %p348, %p349
      %p352 = scmp.ne.s32.totalorder %s335, %s351
      %p353 = scmp.eq.s32.totalorder %s39, 0
      %p354 = por %p352, %p353
      %s355 = ssub.s32 %s41, %s48
      %p356 = scmp.eq.s32.totalorder %s355, 0
      %s358 = sadd.s32 %s357, 1
      %s359 = scalar_select %p356, %s357, %s358
      %p362 = pneg %p356
      %p363 = scmp.eq.s32.totalorder %s33, 5
      %p364 = por %p362, %p363
      %p365 = scmp.ne.s32.totalorder %s357, %s360
      %p366 = scmp.eq.s32.totalorder %s33, 0
      %p367 = por %p365, %p366
      %p368 = scmp.ne.s32.totalorder %s357, %s360
      %p369 = scmp.eq.s32.totalorder %s38, 5
      %p370 = por %p368, %p369
      %p371 = scmp.ne.s32.totalorder %s360, %s361
      %p372 = scmp.eq.s32.totalorder %s38, 0
      %p373 = por %p371, %p372
      %p374 = scmp.ne.s32.totalorder %s360, %s361
      %p375 = scmp.eq.s32.totalorder %s39, 5
      %p376 = por %p374, %p375
      %p378 = scmp.ne.s32.totalorder %s361, %s377
      %p379 = scmp.eq.s32.totalorder %s39, 0
      %p380 = por %p378, %p379
      %s381 = ssub.s32 %s41, %s48
      %p382 = scmp.eq.s32.totalorder %s381, 0
      %s384 = sadd.s32 %s383, 1
      %s385 = scalar_select %p382, %s383, %s384
      %p388 = pneg %p382
      %p389 = scmp.eq.s32.totalorder %s33, 5
      %p390 = por %p388, %p389
      %p391 = scmp.ne.s32.totalorder %s383, %s386
      %p392 = scmp.eq.s32.totalorder %s33, 0
      %p393 = por %p391, %p392
      %p394 = scmp.ne.s32.totalorder %s383, %s386
      %p395 = scmp.eq.s32.totalorder %s38, 5
      %p396 = por %p394, %p395
      %p397 = scmp.ne.s32.totalorder %s386, %s387
      %p398 = scmp.eq.s32.totalorder %s38, 0
      %p399 = por %p397, %p398
      %p400 = scmp.ne.s32.totalorder %s386, %s387
      %p401 = scmp.eq.s32.totalorder %s39, 5
      %p402 = por %p400, %p401
      %p404 = scmp.ne.s32.totalorder %s387, %s403
      %p405 = scmp.eq.s32.totalorder %s39, 0
      %p406 = por %p404, %p405
      %s407 = ssub.s32 %s41, %s48
      %p408 = scmp.eq.s32.totalorder %s407, 0
      %s410 = sadd.s32 %s409, 1
      %s411 = scalar_select %p408, %s409, %s410
      %p414 = pneg %p408
      %p415 = scmp.eq.s32.totalorder %s33, 5
      %p416 = por %p414, %p415
      %p417 = scmp.ne.s32.totalorder %s409, %s412
      %p418 = scmp.eq.s32.totalorder %s33, 0
      %p419 = por %p417, %p418
      %p420 = scmp.ne.s32.totalorder %s409, %s412
      %p421 = scmp.eq.s32.totalorder %s38, 5
      %p422 = por %p420, %p421
      %p423 = scmp.ne.s32.totalorder %s412, %s413
      %p424 = scmp.eq.s32.totalorder %s38, 0
      %p425 = por %p423, %p424
      %p426 = scmp.ne.s32.totalorder %s412, %s413
      %p427 = scmp.eq.s32.totalorder %s39, 5
      %p428 = por %p426, %p427
      %p430 = scmp.ne.s32.totalorder %s413, %s429
      %p431 = scmp.eq.s32.totalorder %s39, 0
      %p432 = por %p430, %p431
      %s433 = ssub.s32 %s40, %s52
      %p434 = scmp.eq.s32.totalorder %s433, 0
      %s436 = sadd.s32 %s435, 1
      %s437 = scalar_select %p434, %s435, %s436
      %p440 = pneg %p434
      %p441 = scmp.eq.s32.totalorder %s33, 5
      %p442 = por %p440, %p441
      %p443 = scmp.ne.s32.totalorder %s435, %s438
      %p444 = scmp.eq.s32.totalorder %s33, 0
      %p445 = por %p443, %p444
      %p446 = scmp.ne.s32.totalorder %s435, %s438
      %p447 = scmp.eq.s32.totalorder %s38, 5
      %p448 = por %p446, %p447
      %p449 = scmp.ne.s32.totalorder %s438, %s439
      %p450 = scmp.eq.s32.totalorder %s38, 0
      %p451 = por %p449, %p450
      %p452 = scmp.ne.s32.totalorder %s438, %s439
      %p453 = scmp.eq.s32.totalorder %s39, 5
      %p454 = por %p452, %p453
      %p456 = scmp.ne.s32.totalorder %s439, %s455
      %p457 = scmp.eq.s32.totalorder %s39, 0
      %p458 = por %p456, %p457
      %p459 = scmp.le.s32.totalorder 1, %s33
      %p460 = scmp.lt.s32.totalorder %s33, 7
      %p461 = pnand %p459, %p460
      %p462 = pneg %p461
      // Predicated region
      $region9: #{tpu_custom_call.1} parent=5 // pred_check
        _
      $region10: #{tpu_custom_call.1} parent=5 // pred_check_branch
        %464 = sbr.rel (%p461) target = $region12
      $region11: #{tpu_custom_call.1} parent=5 // pred_region
        %s465 = ssub.s32 %s33, 1
        // Predicated region
        $region13: #{tpu_custom_call.1} parent=11 // pred_check
          %p466 = pneg %p92
        $region14: #{tpu_custom_call.1} parent=11 // pred_check_branch
          %468 = sbr.rel (%p466) target = $region16
        $region15: #{tpu_custom_call.1} parent=11 // pred_region
          _
        $region16: #{tpu_custom_call.1} parent=11 // pred_fallthru
          _
        // Predicated region
        $region17: #{tpu_custom_call.1} parent=11 // pred_check
          %p469 = pneg %p113
        $region18: #{tpu_custom_call.1} parent=11 // pred_check_branch
          %471 = sbr.rel (%p469) target = $region20
        $region19: #{tpu_custom_call.1} parent=11 // pred_region
          _
        $region20: #{tpu_custom_call.1} parent=11 // pred_fallthru
          _
      $region12: #{tpu_custom_call.1} parent=5 // pred_fallthru
        _
      %p472 = scmp.lt.s32.totalorder %s33, 6
      // Predicated region
      $region21: #{tpu_custom_call.1} parent=5 // pred_check
        %p473 = pneg %p472
      $region22: #{tpu_custom_call.1} parent=5 // pred_check_branch
        %475 = sbr.rel (%p473) target = $region24
      $region23: #{tpu_custom_call.1} parent=5 // pred_region
        // Predicated region
        $region25: #{tpu_custom_call.1} parent=23 // pred_check
          %p476 = pneg %p65
        $region26: #{tpu_custom_call.1} parent=23 // pred_check_branch
          %478 = sbr.rel (%p476) target = $region28
        $region27: #{tpu_custom_call.1} parent=23 // pred_region
          %s479 = smul.u32 2, %s40
          %p480 = scmp.lt.s32.totalorder %s479, 3
          %s481 = scalar_select %p480, %s479, 3
          %s482 = smul.addr %s481, 2
          %s483 = smul.addr %s482, 8
          %s484 = scalar_lea.vmem %s0, %s483
          %s485 = smul.u32 2, %s40
        $region28: #{tpu_custom_call.1} parent=23 // pred_fallthru
          _
        // Predicated region
        $region29: #{tpu_custom_call.1} parent=23 // pred_check
          %p486 = pneg %p133
        $region30: #{tpu_custom_call.1} parent=23 // pred_check_branch
          %488 = sbr.rel (%p486) target = $region32
        $region31: #{tpu_custom_call.1} parent=23 // pred_region
          %p489 = scmp.lt.s32.totalorder %s41, 2
          %s490 = scalar_select %p489, %s41, 2
          %s491 = smul.addr %s490, 16
          %s492 = smul.addr %s491, 4
          %s493 = scalar_lea.vmem %s3, %s492
        $region32: #{tpu_custom_call.1} parent=23 // pred_fallthru
          _
        // Predicated region
        $region33: #{tpu_custom_call.1} parent=23 // pred_check
          %p494 = pneg %p159
        $region34: #{tpu_custom_call.1} parent=23 // pred_check_branch
          %496 = sbr.rel (%p494) target = $region36
        $region35: #{tpu_custom_call.1} parent=23 // pred_region
          %p497 = scmp.lt.s32.totalorder %s41, 2
          %s498 = scalar_select %p497, %s41, 2
          %s499 = smul.addr %s498, 2
          %s500 = scalar_lea.vmem %s4, %s499
        $region36: #{tpu_custom_call.1} parent=23 // pred_fallthru
          _
        // Predicated region
        $region37: #{tpu_custom_call.1} parent=23 // pred_check
          %p501 = pneg %p185
        $region38: #{tpu_custom_call.1} parent=23 // pred_check_branch
          %503 = sbr.rel (%p501) target = $region40
        $region39: #{tpu_custom_call.1} parent=23 // pred_region
          %p504 = scmp.lt.s32.totalorder %s41, 2
          %s505 = scalar_select %p504, %s41, 2
          %s506 = smul.addr %s505, 8
          %s507 = smul.addr %s506, 4
          %s508 = scalar_lea.vmem %s5, %s507
        $region40: #{tpu_custom_call.1} parent=23 // pred_fallthru
          _
        // Predicated region
        $region41: #{tpu_custom_call.1} parent=23 // pred_check
          %p509 = pneg %p211
        $region42: #{tpu_custom_call.1} parent=23 // pred_check_branch
          %511 = sbr.rel (%p509) target = $region44
        $region43: #{tpu_custom_call.1} parent=23 // pred_region
          %s512 = sand.u32 %s201, 1
          %s513 = scalar_lea.sflag [#allocation5], %s512
          %s514 = sand.u32 %s201, 1
          %s515 = scalar_lea.vmem [#allocation4], %s514
          %s517 = ssub.s32 16, 16
          %518 = vsyncadd %s513, %s517
          %s519 = smul.addr %s41, 16
          %s520 = scalar_lea.hbm %s6, %s519
          %s522 = sshll.u32 %s515, 4
          %s523 = int_to_ptr.vmem [resolvable:$true] %s522
          %525 = dma.hbm_to_vmem [thread:$0]  %s520, 16, %s523, %s513
        $region44: #{tpu_custom_call.1} parent=23 // pred_fallthru
          _
        // Predicated region
        $region45: #{tpu_custom_call.1} parent=23 // pred_check
          %p526 = pneg %p237
        $region46: #{tpu_custom_call.1} parent=23 // pred_check_branch
          %528 = sbr.rel (%p526) target = $region48
        $region47: #{tpu_custom_call.1} parent=23 // pred_region
          %s529 = sand.u32 %s33, 1
          %s530 = scalar_lea.sflag [#allocation8], %s529
          %s531 = sand.u32 %s227, 1
          %s532 = scalar_lea.vmem [#allocation7], %s531
          %s534 = ssub.s32 16, 16
          %535 = vsyncadd %s530, %s534
          %s536 = smul.addr %s41, 16
          %s537 = scalar_lea.hbm %s7, %s536
          %s539 = sshll.u32 %s532, 4
          %s540 = int_to_ptr.vmem [resolvable:$true] %s539
          %542 = dma.hbm_to_vmem [thread:$0]  %s537, 16, %s540, %s530
        $region48: #{tpu_custom_call.1} parent=23 // pred_fallthru
          _
        // Predicated region
        $region49: #{tpu_custom_call.1} parent=23 // pred_check
          %p543 = pneg %p263
        $region50: #{tpu_custom_call.1} parent=23 // pred_check_branch
          %545 = sbr.rel (%p543) target = $region52
        $region51: #{tpu_custom_call.1} parent=23 // pred_region
          %s546 = sand.u32 %s33, 1
          %s547 = scalar_lea.sflag [#allocation8], %s546
          %s548 = sand.u32 %s253, 1
          %s549 = scalar_lea.vmem [#allocation9], %s548
          %s551 = ssub.s32 16, 16
          %552 = vsyncadd %s547, %s551
          %s553 = smul.addr %s41, 16
          %s554 = scalar_lea.hbm %s8, %s553
          %s556 = sshll.u32 %s549, 4
          %s557 = int_to_ptr.vmem [resolvable:$true] %s556
          %559 = dma.hbm_to_vmem [thread:$0]  %s554, 16, %s557, %s547
        $region52: #{tpu_custom_call.1} parent=23 // pred_fallthru
          _
        // Predicated region
        $region53: #{tpu_custom_call.1} parent=23 // pred_check
          %p560 = pneg %p289
        $region54: #{tpu_custom_call.1} parent=23 // pred_check_branch
          %562 = sbr.rel (%p560) target = $region56
        $region55: #{tpu_custom_call.1} parent=23 // pred_region
          %s563 = sand.u32 %s33, 1
          %s564 = scalar_lea.sflag [#allocation11], %s563
          %s565 = sand.u32 %s279, 1
          %s566 = scalar_lea.vmem [#allocation10], %s565
          %s568 = ssub.s32 16, 16
          %569 = vsyncadd %s564, %s568
          %s570 = smul.addr %s41, 16
          %s571 = scalar_lea.hbm %s9, %s570
          %s573 = sshll.u32 %s566, 4
          %s574 = int_to_ptr.vmem [resolvable:$true] %s573
          %576 = dma.hbm_to_vmem [thread:$0]  %s571, 16, %s574, %s564
        $region56: #{tpu_custom_call.1} parent=23 // pred_fallthru
          _
        // Predicated region
        $region57: #{tpu_custom_call.1} parent=23 // pred_check
          %p577 = pneg %p315
        $region58: #{tpu_custom_call.1} parent=23 // pred_check_branch
          %579 = sbr.rel (%p577) target = $region60
        $region59: #{tpu_custom_call.1} parent=23 // pred_region
          %s580 = sand.u32 %s33, 1
          %s581 = scalar_lea.sflag [#allocation11], %s580
          %s582 = sand.u32 %s305, 1
          %s583 = scalar_lea.vmem [#allocation12], %s582
          %s585 = ssub.s32 16, 16
          %586 = vsyncadd %s581, %s585
          %s587 = smul.addr %s41, 16
          %s588 = scalar_lea.hbm %s10, %s587
          %s590 = sshll.u32 %s583, 4
          %s591 = int_to_ptr.vmem [resolvable:$true] %s590
          %593 = dma.hbm_to_vmem [thread:$0]  %s588, 16, %s591, %s581
        $region60: #{tpu_custom_call.1} parent=23 // pred_fallthru
          _
        // Predicated region
        $region61: #{tpu_custom_call.1} parent=23 // pred_check
          %p594 = pneg %p341
        $region62: #{tpu_custom_call.1} parent=23 // pred_check_branch
          %596 = sbr.rel (%p594) target = $region64
        $region63: #{tpu_custom_call.1} parent=23 // pred_region
          %p597 = scmp.lt.s32.totalorder %s41, 2
          %s598 = scalar_select %p597, %s41, 2
          %s599 = smul.addr %s598, 16
          %s600 = smul.addr %s599, 4
          %s601 = scalar_lea.vmem %s11, %s600
        $region64: #{tpu_custom_call.1} parent=23 // pred_fallthru
          _
        // Predicated region
        $region65: #{tpu_custom_call.1} parent=23 // pred_check
          %p602 = pneg %p367
        $region66: #{tpu_custom_call.1} parent=23 // pred_check_branch
          %604 = sbr.rel (%p602) target = $region68
        $region67: #{tpu_custom_call.1} parent=23 // pred_region
          %p605 = scmp.lt.s32.totalorder %s41, 2
          %s606 = scalar_select %p605, %s41, 2
          %s607 = smul.addr %s606, 2
          %s608 = scalar_lea.vmem %s12, %s607
        $region68: #{tpu_custom_call.1} parent=23 // pred_fallthru
          _
        // Predicated region
        $region69: #{tpu_custom_call.1} parent=23 // pred_check
          %p609 = pneg %p393
        $region70: #{tpu_custom_call.1} parent=23 // pred_check_branch
          %611 = sbr.rel (%p609) target = $region72
        $region71: #{tpu_custom_call.1} parent=23 // pred_region
          %p612 = scmp.lt.s32.totalorder %s41, 2
          %s613 = scalar_select %p612, %s41, 2
          %s614 = smul.addr %s613, 32
          %s615 = smul.addr %s614, 4
          %s616 = scalar_lea.vmem %s13, %s615
        $region72: #{tpu_custom_call.1} parent=23 // pred_fallthru
          _
        // Predicated region
        $region73: #{tpu_custom_call.1} parent=23 // pred_check
          %p617 = pneg %p419
        $region74: #{tpu_custom_call.1} parent=23 // pred_check_branch
          %619 = sbr.rel (%p617) target = $region76
        $region75: #{tpu_custom_call.1} parent=23 // pred_region
          %p620 = scmp.lt.s32.totalorder %s41, 2
          %s621 = scalar_select %p620, %s41, 2
          %s622 = scalar_lea.vmem %s14, %s621
        $region76: #{tpu_custom_call.1} parent=23 // pred_fallthru
          _
      $region24: #{tpu_custom_call.1} parent=5 // pred_fallthru
        _
      %p623 = scmp.le.s32.totalorder 1, %s33
      %p624 = scmp.lt.s32.totalorder %s33, 7
      %p625 = pnand %p623, %p624
      %p626 = pneg %p625
      // Predicated region
      $region77: #{tpu_custom_call.1} parent=5 // pred_check
        _
      $region78: #{tpu_custom_call.1} parent=5 // pred_check_branch
        %628 = sbr.rel (%p625) target = $region80
      $region79: #{tpu_custom_call.1} parent=5 // pred_region
        %s629 = ssub.s32 %s33, 1
        %s630 = sand.u32 %s204, 1
        %s631 = scalar_lea.sflag [#allocation5], %s630
        %s632 = sand.u32 %s204, 1
        %s633 = scalar_lea.vmem [#allocation4], %s632
        // Predicated region
        $region81: #{tpu_custom_call.1} parent=79 // pred_check
          %p634 = pneg %p217
        $region82: #{tpu_custom_call.1} parent=79 // pred_check_branch
          %636 = sbr.rel (%p634) target = $region84
        $region83: #{tpu_custom_call.1} parent=79 // pred_region
          %637 = dma.done %s631, 16
        $region84: #{tpu_custom_call.1} parent=79 // pred_fallthru
          _
        %s638 = sand.u32 %s38, 1
        %s639 = scalar_lea.sflag [#allocation8], %s638
        %s640 = sand.u32 %s230, 1
        %s641 = scalar_lea.vmem [#allocation7], %s640
        // Predicated region
        $region85: #{tpu_custom_call.1} parent=79 // pred_check
          %p642 = pneg %p243
        $region86: #{tpu_custom_call.1} parent=79 // pred_check_branch
          %644 = sbr.rel (%p642) target = $region88
        $region87: #{tpu_custom_call.1} parent=79 // pred_region
          %645 = dma.done %s639, 16
        $region88: #{tpu_custom_call.1} parent=79 // pred_fallthru
          _
        %s646 = sand.u32 %s38, 1
        %s647 = scalar_lea.sflag [#allocation8], %s646
        %s648 = sand.u32 %s256, 1
        %s649 = scalar_lea.vmem [#allocation9], %s648
        // Predicated region
        $region89: #{tpu_custom_call.1} parent=79 // pred_check
          %p650 = pneg %p269
        $region90: #{tpu_custom_call.1} parent=79 // pred_check_branch
          %652 = sbr.rel (%p650) target = $region92
        $region91: #{tpu_custom_call.1} parent=79 // pred_region
          %653 = dma.done %s647, 16
        $region92: #{tpu_custom_call.1} parent=79 // pred_fallthru
          _
        %s654 = sand.u32 %s38, 1
        %s655 = scalar_lea.sflag [#allocation11], %s654
        %s656 = sand.u32 %s282, 1
        %s657 = scalar_lea.vmem [#allocation10], %s656
        // Predicated region
        $region93: #{tpu_custom_call.1} parent=79 // pred_check
          %p658 = pneg %p295
        $region94: #{tpu_custom_call.1} parent=79 // pred_check_branch
          %660 = sbr.rel (%p658) target = $region96
        $region95: #{tpu_custom_call.1} parent=79 // pred_region
          %661 = dma.done %s655, 16
        $region96: #{tpu_custom_call.1} parent=79 // pred_fallthru
          _
        %s662 = sand.u32 %s38, 1
        %s663 = scalar_lea.sflag [#allocation11], %s662
        %s664 = sand.u32 %s308, 1
        %s665 = scalar_lea.vmem [#allocation12], %s664
        // Predicated region
        $region97: #{tpu_custom_call.1} parent=79 // pred_check
          %p666 = pneg %p321
        $region98: #{tpu_custom_call.1} parent=79 // pred_check_branch
          %668 = sbr.rel (%p666) target = $region100
        $region99: #{tpu_custom_call.1} parent=79 // pred_region
          %669 = dma.done %s663, 16
        $region100: #{tpu_custom_call.1} parent=79 // pred_fallthru
          _
        %s670 = smul.u32 2, %s42
        %p671 = scmp.lt.s32.totalorder %s670, 3
        %s672 = scalar_select %p671, %s670, 3
        %s673 = smul.addr %s672, 2
        %s674 = smul.addr %s673, 8
        %s675 = scalar_lea.vmem %s0, %s674
        %p676 = pneg %p71
        %p677 = pneg %p68
        %p678 = pneg %p92
        %p679 = pneg %p89
        %p680 = pneg %p113
        %p681 = pneg %p110
        %p682 = scmp.lt.s32.totalorder %s43, 2
        %s683 = scalar_select %p682, %s43, 2
        %s684 = smul.addr %s683, 16
        %s685 = smul.addr %s684, 4
        %s686 = scalar_lea.vmem %s3, %s685
        %p687 = pneg %p139
        %p688 = pneg %p136
        %p689 = scmp.lt.s32.totalorder %s43, 2
        %s690 = scalar_select %p689, %s43, 2
        %s691 = smul.addr %s690, 2
        %s692 = scalar_lea.vmem %s4, %s691
        %p693 = pneg %p165
        %p694 = pneg %p162
        %p695 = scmp.lt.s32.totalorder %s43, 2
        %s696 = scalar_select %p695, %s43, 2
        %s697 = smul.addr %s696, 8
        %s698 = smul.addr %s697, 4
        %s699 = scalar_lea.vmem %s5, %s698
        %p700 = pneg %p191
        %p701 = pneg %p188
        %s702 = sand.u32 %s204, 1
        %s703 = scalar_lea.sflag [#allocation5], %s702
        %s704 = sand.u32 %s204, 1
        %s705 = scalar_lea.vmem [#allocation4], %s704
        %p706 = pneg %p217
        %p707 = pneg %p214
        %s708 = sand.u32 %s38, 1
        %s709 = scalar_lea.sflag [#allocation8], %s708
        %s710 = sand.u32 %s230, 1
        %s711 = scalar_lea.vmem [#allocation7], %s710
        %p712 = pneg %p243
        %p713 = pneg %p240
        %s714 = sand.u32 %s38, 1
        %s715 = scalar_lea.sflag [#allocation8], %s714
        %s716 = sand.u32 %s256, 1
        %s717 = scalar_lea.vmem [#allocation9], %s716
        %p718 = pneg %p269
        %p719 = pneg %p266
        %s720 = sand.u32 %s38, 1
        %s721 = scalar_lea.sflag [#allocation11], %s720
        %s722 = sand.u32 %s282, 1
        %s723 = scalar_lea.vmem [#allocation10], %s722
        %p724 = pneg %p295
        %p725 = pneg %p292
        %s726 = sand.u32 %s38, 1
        %s727 = scalar_lea.sflag [#allocation11], %s726
        %s728 = sand.u32 %s308, 1
        %s729 = scalar_lea.vmem [#allocation12], %s728
        %p730 = pneg %p321
        %p731 = pneg %p318
        %p732 = scmp.lt.s32.totalorder %s43, 2
        %s733 = scalar_select %p732, %s43, 2
        %s734 = smul.addr %s733, 16
        %s735 = smul.addr %s734, 4
        %s736 = scalar_lea.vmem %s11, %s735
        %p737 = pneg %p347
        %p738 = pneg %p344
        %p739 = scmp.lt.s32.totalorder %s43, 2
        %s740 = scalar_select %p739, %s43, 2
        %s741 = smul.addr %s740, 2
        %s742 = scalar_lea.vmem %s12, %s741
        %p743 = pneg %p373
        %p744 = pneg %p370
        %p745 = scmp.lt.s32.totalorder %s43, 2
        %s746 = scalar_select %p745, %s43, 2
        %s747 = smul.addr %s746, 32
        %s748 = smul.addr %s747, 4
        %s749 = scalar_lea.vmem %s13, %s748
        %p750 = pneg %p399
        %p751 = pneg %p396
        %p752 = scmp.lt.s32.totalorder %s43, 2
        %s753 = scalar_select %p752, %s43, 2
        %s754 = scalar_lea.vmem %s14, %s753
        %p755 = pneg %p425
        %p756 = pneg %p422
        %p757 = pneg %p451
        %p758 = pneg %p448
        %s759 = sand.u32 %s438, 1
        %s760 = scalar_lea.sflag [#allocation6], %s759
        %s761 = sand.u32 %s438, 1
        %s762 = smul.addr %s761, 32
        %s763 = scalar_lea.vmem [#allocation13], %s762
        %s764 = smul.u32 2, %s42
        %p765 = scmp.lt.s32.totalorder %s764, 3
        %s766 = scalar_select %p765, %s764, 3
        %s767 = smul.addr %s766, 2
        %s768 = smul.addr %s767, 8
        %s769 = scalar_lea.vmem %s0, %s768
        %s770 = smul.u32 2, %s42
        %p771 = scmp.lt.s32.totalorder %s43, 2
        %s772 = scalar_select %p771, %s43, 2
        %s773 = smul.addr %s772, 16
        %s774 = smul.addr %s773, 4
        %s775 = scalar_lea.vmem %s3, %s774
        %p776 = scmp.lt.s32.totalorder %s43, 2
        %s777 = scalar_select %p776, %s43, 2
        %s778 = smul.addr %s777, 2
        %s779 = scalar_lea.vmem %s4, %s778
        %p780 = scmp.lt.s32.totalorder %s43, 2
        %s781 = scalar_select %p780, %s43, 2
        %s782 = smul.addr %s781, 8
        %s783 = smul.addr %s782, 4
        %s784 = scalar_lea.vmem %s5, %s783
        %p785 = scmp.lt.s32.totalorder %s43, 2
        %s786 = scalar_select %p785, %s43, 2
        %s787 = smul.addr %s786, 16
        %s788 = smul.addr %s787, 4
        %s789 = scalar_lea.vmem %s11, %s788
        %p790 = scmp.lt.s32.totalorder %s43, 2
        %s791 = scalar_select %p790, %s43, 2
        %s792 = smul.addr %s791, 2
        %s793 = scalar_lea.vmem %s12, %s792
        %p794 = scmp.lt.s32.totalorder %s43, 2
        %s795 = scalar_select %p794, %s43, 2
        %s796 = smul.addr %s795, 32
        %s797 = smul.addr %s796, 4
        %s798 = scalar_lea.vmem %s13, %s797
        %p799 = scmp.lt.s32.totalorder %s43, 2
        %s800 = scalar_select %p799, %s43, 2
        %s801 = scalar_lea.vmem %s14, %s800
        %s802 = smul.u32 2, %s42
        %p804 = scmp.eq.s32.totalorder %s43, 0
        // Predicated region
        $region101: #{tpu_custom_call.1} parent=79 // pred_check
          %p805 = pneg %p804
        $region102: #{tpu_custom_call.1} parent=79 // pred_check_branch
          %807 = sbr.rel (%p805) target = $region104
        $region103: #{tpu_custom_call.1} parent=79 // pred_region
          %v808 = vld [vmem:[%s769] sm:$0xff]
          %v809 = vld [vmem:[%s769 + $0x8] sm:$0xff]
          %v810 = vld [vmem:[%s769 + $0x10] sm:$0xff]
          %v811 = vld [vmem:[%s769 + $0x18] sm:$0xff]
          %v812 = vld [vmem:[%s1] sm:$0xff]
          %v813 = vld [vmem:[%s1 + $0x8] sm:$0xff]
          %v814 = vadd.f32 %v808, %v812
          %v815 = vadd.f32 %v809, %v813
          %v816 = vadd.f32 %v810, %v812
          %v817 = vadd.f32 %v811, %v813
          %vm818 = vcmask 523264
          %819 = vst.msk [vmem:[%s763] sm:$0xff] %vm818, %v814
          %820 = vst.msk [vmem:[%s763 + $0x8] sm:$0xff] %vm818, %v815
          %821 = vst.msk [vmem:[%s763 + $0x10] sm:$0xff] %vm818, %v816
          %822 = vst.msk [vmem:[%s763 + $0x18] sm:$0xff] %vm818, %v817
        $region104: #{tpu_custom_call.1} parent=79 // pred_fallthru
          _
        %v823 = vld [vmem:[%s763] sm:$0xff]
        %v824 = vld [vmem:[%s763 + $0x8] sm:$0xff]
        %v825 = vld [vmem:[%s763 + $0x10] sm:$0xff]
        %v826 = vld [vmem:[%s763 + $0x18] sm:$0xff]
        %v827 = vld [vmem:[%s641] sm:$0x1]
        %v828 = vld [vmem:[%s649] sm:$0x1]
        %vm829 = vcmask 523264
        %v830 = vsel %vm829, %v823, 0.0
        %831 = vadd.xlane.f32.xlu0 %v830
        %v832 = vpop.xlane.xlu0 %831
        %v833 = vsel %vm829, %v824, 0.0
        %834 = vadd.xlane.f32.xlu0 %v833
        %v835 = vpop.xlane.xlu0 %834
        %v836 = vsel %vm829, %v825, 0.0
        %837 = vadd.xlane.f32.xlu0 %v836
        %v838 = vpop.xlane.xlu0 %837
        %v839 = vsel %vm829, %v826, 0.0
        %840 = vadd.xlane.f32.xlu0 %v839
        %v841 = vpop.xlane.xlu0 %840
        %v842 = vrcp.pop 64.0
        %v843 = vmul.f32 %v832, %v842
        %v844 = vmul.f32 %v835, %v842
        %v845 = vmul.f32 %v838, %v842
        %v846 = vmul.f32 %v841, %v842
        %v847 = vsub.f32 %v823, %v843
        %v848 = vsub.f32 %v824, %v844
        %v849 = vsub.f32 %v825, %v845
        %v850 = vsub.f32 %v826, %v846
        %v851 = vmul.f32 %v847, %v847
        %v852 = vmul.f32 %v848, %v848
        %v853 = vmul.f32 %v849, %v849
        %v854 = vmul.f32 %v850, %v850
        %v855 = vsel %vm829, %v851, 0.0
        %856 = vadd.xlane.f32.xlu0 %v855
        %v857 = vpop.xlane.xlu0 %856
        %v858 = vsel %vm829, %v852, 0.0
        %859 = vadd.xlane.f32.xlu0 %v858
        %v860 = vpop.xlane.xlu0 %859
        %v861 = vsel %vm829, %v853, 0.0
        %862 = vadd.xlane.f32.xlu0 %v861
        %v863 = vpop.xlane.xlu0 %862
        %v864 = vsel %vm829, %v854, 0.0
        %865 = vadd.xlane.f32.xlu0 %v864
        %v866 = vpop.xlane.xlu0 %865
        %v867 = vmul.f32 %v857, %v842
        %v868 = vmul.f32 %v860, %v842
        %v869 = vmul.f32 %v863, %v842
        %v870 = vmul.f32 %v866, %v842
        %v871 = vadd.f32 %v867, 1e-05
        %v872 = vadd.f32 %v868, 1e-05
        %v873 = vadd.f32 %v869, 1e-05
        %v874 = vadd.f32 %v870, 1e-05
        %v875 = vrsqrt.pop %v871
        %v876 = vrsqrt.pop %v872
        %v877 = vrsqrt.pop %v873
        %v878 = vrsqrt.pop %v874
        %v879 = vmul.f32 %v847, %v875
        %v880 = vmul.f32 %v848, %v876
        %v881 = vmul.f32 %v849, %v877
        %v882 = vmul.f32 %v850, %v878
        %v884 = vlaneseq
        %v885 = vshrl.u32 %v884, 7
        %v886 = vsub.s32 0, %v885
        %v887 = vrot.slane %v827, %v886
        %v889 = vmul.f32 %v879, %v887
        %v890 = vmul.f32 %v880, %v887
        %v891 = vmul.f32 %v881, %v887
        %v892 = vmul.f32 %v882, %v887
        %v894 = vlaneseq
        %v895 = vshrl.u32 %v894, 7
        %v896 = vsub.s32 0, %v895
        %v897 = vrot.slane %v828, %v896
        %v899 = vadd.f32 %v889, %v897
        %v900 = vadd.f32 %v890, %v897
        %v901 = vadd.f32 %v891, %v897
        %v902 = vadd.f32 %v892, %v897
        %v903 = vpack.c.bf16 %v900, %v899
        %v904 = vpack.c.bf16 %v902, %v901
        %v905 = vld [vmem:[%s775] sm:$0xff]
        %v906 = vld [vmem:[%s775 + $0x8] sm:$0xff]
        %v907 = vld [vmem:[%s775 + $0x10] sm:$0xff]
        %v908 = vld [vmem:[%s775 + $0x18] sm:$0xff]
        %v909 = vld [vmem:[%s775 + $0x20] sm:$0xff]
        %v910 = vld [vmem:[%s775 + $0x28] sm:$0xff]
        %v911 = vld [vmem:[%s775 + $0x30] sm:$0xff]
        %v912 = vld [vmem:[%s775 + $0x38] sm:$0xff]
        %v913 = vld [vmem:[%s779] sm:$0x3]
        %v915 = vlaneseq
        %v916 = vshrl.u32 %v915, 7
        %v917 = vsub.s32 0, %v916
        %v918 = vrot.slane %v913, %v917
        %v919 = vlaneseq
        %v920 = vshrl.u32 %v919, 7
        %v921 = vsub.s32 1, %v920
        %v922 = vrot.slane %v913, %v921
        %v933 = vunpack.c.l.b16 %v905
        %v934 = vunpack.c.h.b16 %v905
        %v935 = vunpack.c.l.b16 %v906
        %v936 = vunpack.c.h.b16 %v906
        %v937 = vunpack.c.l.b16 %v907
        %v938 = vunpack.c.h.b16 %v907
        %v939 = vunpack.c.l.b16 %v908
        %v940 = vunpack.c.h.b16 %v908
        %v941 = vunpack.c.l.b16 %v909
        %v942 = vunpack.c.h.b16 %v909
        %v943 = vunpack.c.l.b16 %v910
        %v944 = vunpack.c.h.b16 %v910
        %v945 = vunpack.c.l.b16 %v911
        %v946 = vunpack.c.h.b16 %v911
        %v947 = vunpack.c.l.b16 %v912
        %v948 = vunpack.c.h.b16 %v912
        %v949 = vpack.c.b16 %v935, %v933
        %v950 = vpack.c.b16 %v936, %v934
        %v951 = vpack.c.b16 %v939, %v937
        %v952 = vpack.c.b16 %v940, %v938
        %v953 = vpack.c.b16 %v943, %v941
        %v954 = vpack.c.b16 %v944, %v942
        %v955 = vpack.c.b16 %v947, %v945
        %v956 = vpack.c.b16 %v948, %v946
        %v966 = vsel %vm829, %v903, 0
        %v969 = vsel %vm829, %v904, 0
        %971 = vmatprep.subr.bf16.mxu0 0
        %972 = vmatpush1.bf16.msra.mxu0 0
        %973 = vmatprep.subr.bf16.mxu0 0
        %974 = vmatpush1.bf16.msra.mxu0 0
        %975 = vmatprep.subr.bf16.mxu0 0
        %976 = vmatpush1.bf16.msra.mxu0 0
        %977 = vmatprep.subr.bf16.mxu0 0
        %978 = vmatpush1.bf16.msra.mxu0 0
        %979 = vmatprep.subr.bf16.mxu0 %v956
        %980 = vmatpush1.bf16.msra.mxu0 %v955
        %981 = vmatprep.subr.bf16.mxu0 %v954
        %982 = vmatpush1.bf16.msra.mxu0 %v953
        %983 = vmatprep.subr.bf16.mxu0 %v952
        %984 = vmatpush1.bf16.msra.mxu0 %v951
        %985 = vmatprep.subr.bf16.mxu0 %v950
        %986 = vmatpush1.bf16.msra.mxu0 %v949
        %987 = vmatprep.subr.bf16.mxu0 0
        %988 = vmatpush2.bf16.msra.mxu0 0
        %989 = vmatprep.subr.bf16.mxu0 0
        %990 = vmatpush2.bf16.msra.mxu0 0
        %991 = vmatprep.subr.bf16.mxu0 0
        %992 = vmatpush2.bf16.msra.mxu0 0
        %993 = vmatprep.subr.bf16.mxu0 0
        %994 = vmatpush2.bf16.msra.mxu0 0
        %995 = vmatprep.subr.bf16.mxu0 0
        %996 = vmatpush2.bf16.msra.mxu0 0
        %997 = vmatprep.subr.bf16.mxu0 0
        %998 = vmatpush2.bf16.msra.mxu0 0
        %999 = vmatprep.subr.bf16.mxu0 0
        %1000 = vmatpush2.bf16.msra.mxu0 0
        %1001 = vmatprep.subr.bf16.mxu0 0
        %1002 = vmatpush2.bf16.msra.mxu0 0
        %1003 = vmatprep.mubr.bf16.mxu0 0
        %1004 = vmatmul.mubr.bf16.gmra.mxu0 %v966
        %v1005 = vpop.f32.mrf.mxu0
        %v1006 = vadd.f32 %v918, %v1005
        %v1007 = vpop.f32.mrf.mxu0
        %v1008 = vadd.f32 %v922, %v1007
        %v1009 = vpop.f32.mrf.mxu0
        %v1010 = vadd.f32 %v918, %v1009
        %v1011 = vpop.f32.mrf.mxu0
        %v1012 = vadd.f32 %v922, %v1011
        %1013 = vmatprep.mubr.bf16.mxu0 0
        %1014 = vmatmul.mubr.bf16.gmra.mxu0 %v969
        %v1015 = vpop.f32.mrf.mxu0
        %v1016 = vadd.f32 %v918, %v1015
        %v1017 = vpop.f32.mrf.mxu0
        %v1018 = vadd.f32 %v922, %v1017
        %v1019 = vpop.f32.mrf.mxu0
        %v1020 = vadd.f32 %v918, %v1019
        %v1021 = vpop.f32.mrf.mxu0
        %v1022 = vadd.f32 %v922, %v1021
        %1023 = vdwg.mxu0
        %v1024 = vpack.c.bf16 %v1010, %v1006
        %v1025 = vpack.c.bf16 %v1012, %v1008
        %v1026 = vpack.c.bf16 %v1020, %v1016
        %v1027 = vpack.c.bf16 %v1022, %v1018
        %v1032 = vunpack.c.l.b16 %v1024
        %v1033 = vunpack.c.l.b16 %v1025
        %v1034 = vunpack.c.h.b16 %v1024
        %v1035 = vunpack.c.h.b16 %v1025
        %v1036 = vunpack.c.l.b16 %v1026
        %v1037 = vunpack.c.l.b16 %v1027
        %v1038 = vunpack.c.h.b16 %v1026
        %v1039 = vunpack.c.h.b16 %v1027
        %v1040 = vpack.c.b16 %v1033, %v1032
        %v1041 = vpack.c.b16 %v1035, %v1034
        %v1042 = vpack.c.b16 %v1037, %v1036
        %v1043 = vpack.c.b16 %v1039, %v1038
        %vm1048 = vcmask 1043456
        %vm1049 = vcmask 523268
        %vm1050 = vmor %vm1049, %vm1048
        %1051 = vst.msk [vmem:[#allocation2] sm:$0xff] %vm1050, %v1040
        %1052 = vst.msk [vmem:[#allocation2 + $0x8] sm:$0xff] %vm1050, %v1041
        %1053 = vst.msk [vmem:[#allocation2 + $0x10] sm:$0xff] %vm1050, %v1042
        %1054 = vst.msk [vmem:[#allocation2 + $0x18] sm:$0xff] %vm1050, %v1043
        %v1055 = vld [vmem:[%s2] sm:$0xff]
        %v1056 = vld [vmem:[%s2 + $0x8] sm:$0xff]
        loop: start=0, step=1, limit=2
        $region105: #{tpu_custom_call.1} parent=79 // loop_pre_header
          _
        $region106: #{tpu_custom_call.1} parent=79 // loop_header
          %s1058 = sphi 0, %s1062
          %p1059 = scmp.ge.s32.totalorder %s1058, 2
        $region107: #{tpu_custom_call.1} parent=79 // loop_header_branch
          %1061 = sbr.rel (%p1059) target = $region111
        $region108: #{tpu_custom_call.1} parent=79 // loop_body
          %s1063 = smul.u32 %s1058, 4
          %s1064 = smul.addr %s1063, 4
          %s1065 = scalar_lea.vmem [#allocation2], %s1064
          %v1066 = vld [vmem:[%s1065] sm:$0xf]
          %v1067 = vld [vmem:[%s1065 + $0x8] sm:$0xf]
          %v1068 = vld [vmem:[%s1065 + $0x4] sm:$0xf]
          %v1069 = vld [vmem:[%s1065 + $0xc] sm:$0xf]
          %v1072 = vunpack.c.l.b16 %v1066
          %v1073 = vunpack.c.l.b16 %v1067
          %v1074 = vpack.c.b16 %v1073, %v1072
          %1075 = vrot.lane.b32.xlu0 %v1074, 64
          %v1076 = vpop.permute.xlu0 %1075
          %vm1077 = vcmask 130048
          %v1079 = vsel %vm1077, %v1074, 0
          %v1082 = vsel %vm1077, %v1076, 0
          %1084 = vmatprep.subr.bf16.mxu0 0
          %1085 = vmatpush1.bf16.xpose.msra.mxu0 0
          %1086 = vmatprep.subr.bf16.mxu0 0
          %1087 = vmatpush1.bf16.xpose.msra.mxu0 0
          %1088 = vmatprep.subr.bf16.mxu0 0
          %1089 = vmatpush1.bf16.xpose.msra.mxu0 0
          %1090 = vmatprep.subr.bf16.mxu0 0
          %1091 = vmatpush1.bf16.xpose.msra.mxu0 0
          %1092 = vmatprep.subr.bf16.mxu0 0
          %1093 = vmatpush1.bf16.xpose.msra.mxu0 0
          %1094 = vmatprep.subr.bf16.mxu0 0
          %1095 = vmatpush1.bf16.xpose.msra.mxu0 0
          %1096 = vmatprep.subr.bf16.mxu0 0
          %1097 = vmatpush1.bf16.xpose.msra.mxu0 0
          %1098 = vmatprep.subr.bf16.mxu0 0
          %1099 = vmatpush1.bf16.xpose.msra.mxu0 %v1082
          %1100 = vmatprep.subr.bf16.mxu0 0
          %1101 = vmatpush2.bf16.xpose.msra.mxu0 0
          %1102 = vmatprep.subr.bf16.mxu0 0
          %1103 = vmatpush2.bf16.xpose.msra.mxu0 0
          %1104 = vmatprep.subr.bf16.mxu0 0
          %1105 = vmatpush2.bf16.xpose.msra.mxu0 0
          %1106 = vmatprep.subr.bf16.mxu0 0
          %1107 = vmatpush2.bf16.xpose.msra.mxu0 0
          %1108 = vmatprep.subr.bf16.mxu0 0
          %1109 = vmatpush2.bf16.xpose.msra.mxu0 0
          %1110 = vmatprep.subr.bf16.mxu0 0
          %1111 = vmatpush2.bf16.xpose.msra.mxu0 0
          %1112 = vmatprep.subr.bf16.mxu0 0
          %1113 = vmatpush2.bf16.xpose.msra.mxu0 0
          %1114 = vmatprep.subr.bf16.mxu0 0
          %1115 = vmatpush2.bf16.xpose.msra.mxu0 0
          %1116 = vmatprep.mubr.bf16.mxu0 0
          %1117 = vmatmul.mubr.bf16.gmra.mxu0 %v1079
          %v1118 = vpop.f32.mrf.mxu0
          %v1119 = vadd.f32 %v1055, %v1118
          %v1120 = vpop.f32.mrf.mxu0
          %v1121 = vpop.f32.mrf.mxu0
          %v1122 = vadd.f32 %v1056, %v1121
          %v1123 = vpop.f32.mrf.mxu0
          %1124 = vdwg.mxu0
          %v1125 = vsel %vm1077, %v1119, -inf
          %1126 = vmax.xlane.f32.xlu0 %v1125
          %v1127 = vpop.xlane.xlu0 %1126
          %v1128 = vsel %vm1077, %v1122, -inf
          %1129 = vmax.xlane.f32.xlu0 %v1128
          %v1130 = vpop.xlane.xlu0 %1129
          %v1131 = vsub.f32 %v1119, %v1127
          %v1132 = vsub.f32 %v1122, %v1130
          %v1133 = vmul.f32 %v1131, 1.442695
          %v1134 = vpow.pop %v1133
          %v1135 = vmul.f32 %v1132, 1.442695
          %v1136 = vpow.pop %v1135
          %v1137 = vsel %vm1077, %v1134, 0.0
          %1138 = vadd.xlane.f32.xlu0 %v1137
          %v1139 = vpop.xlane.xlu0 %1138
          %v1140 = vsel %vm1077, %v1136, 0.0
          %1141 = vadd.xlane.f32.xlu0 %v1140
          %v1142 = vpop.xlane.xlu0 %1141
          %v1143 = vrcp.pop %v1139
          %v1144 = vrcp.pop %v1142
          %v1145 = vmul.f32 %v1134, %v1143
          %v1146 = vmul.f32 %v1136, %v1144
          %v1147 = vpack.c.bf16 %v1146, %v1145
          %v1150 = vunpack.c.l.b16 %v1068
          %v1151 = vunpack.c.l.b16 %v1069
          %v1152 = vpack.c.b16 %v1151, %v1150
          %v1155 = vsel %vm1077, %v1147, 0
          %1157 = vmatprep.subr.bf16.mxu0 0
          %1158 = vmatpush1.bf16.msra.mxu0 0
          %1159 = vmatprep.subr.bf16.mxu0 0
          %1160 = vmatpush1.bf16.msra.mxu0 0
          %1161 = vmatprep.subr.bf16.mxu0 0
          %1162 = vmatpush1.bf16.msra.mxu0 0
          %1163 = vmatprep.subr.bf16.mxu0 0
          %1164 = vmatpush1.bf16.msra.mxu0 0
          %1165 = vmatprep.subr.bf16.mxu0 0
          %1166 = vmatpush1.bf16.msra.mxu0 0
          %1167 = vmatprep.subr.bf16.mxu0 0
          %1168 = vmatpush1.bf16.msra.mxu0 0
          %1169 = vmatprep.subr.bf16.mxu0 0
          %1170 = vmatpush1.bf16.msra.mxu0 0
          %1171 = vmatprep.subr.bf16.mxu0 0
          %1172 = vmatpush1.bf16.msra.mxu0 %v1152
          %1173 = vmatprep.subr.bf16.mxu0 0
          %1174 = vmatpush2.bf16.msra.mxu0 0
          %1175 = vmatprep.subr.bf16.mxu0 0
          %1176 = vmatpush2.bf16.msra.mxu0 0
          %1177 = vmatprep.subr.bf16.mxu0 0
          %1178 = vmatpush2.bf16.msra.mxu0 0
          %1179 = vmatprep.subr.bf16.mxu0 0
          %1180 = vmatpush2.bf16.msra.mxu0 0
          %1181 = vmatprep.subr.bf16.mxu0 0
          %1182 = vmatpush2.bf16.msra.mxu0 0
          %1183 = vmatprep.subr.bf16.mxu0 0
          %1184 = vmatpush2.bf16.msra.mxu0 0
          %1185 = vmatprep.subr.bf16.mxu0 0
          %1186 = vmatpush2.bf16.msra.mxu0 0
          %1187 = vmatprep.subr.bf16.mxu0 0
          %1188 = vmatpush2.bf16.msra.mxu0 0
          %1189 = vmatprep.mubr.bf16.mxu0 0
          %1190 = vmatmul.mubr.bf16.gmra.mxu0 %v1155
          %v1191 = vpop.f32.mrf.mxu0
          %v1192 = vadd.f32 0.0, %v1191
          %v1193 = vpop.f32.mrf.mxu0
          %v1194 = vpop.f32.mrf.mxu0
          %v1195 = vadd.f32 0.0, %v1194
          %v1196 = vpop.f32.mrf.mxu0
          %1197 = vdwg.mxu0
          %v1198 = vpack.c.bf16 %v1195, %v1192
          %1199 = vrot.lane.b32.xlu0 %v1074, 112
          %v1200 = vpop.permute.xlu0 %1199
          %1201 = vrot.lane.b32.xlu0 %v1074, 48
          %v1202 = vpop.permute.xlu0 %1201
          %v1204 = vsel %vm1077, %v1200, 0
          %v1207 = vsel %vm1077, %v1202, 0
          %1209 = vmatprep.subr.bf16.mxu0 0
          %1210 = vmatpush1.bf16.xpose.msra.mxu0 0
          %1211 = vmatprep.subr.bf16.mxu0 0
          %1212 = vmatpush1.bf16.xpose.msra.mxu0 0
          %1213 = vmatprep.subr.bf16.mxu0 0
          %1214 = vmatpush1.bf16.xpose.msra.mxu0 0
          %1215 = vmatprep.subr.bf16.mxu0 0
          %1216 = vmatpush1.bf16.xpose.msra.mxu0 0
          %1217 = vmatprep.subr.bf16.mxu0 0
          %1218 = vmatpush1.bf16.xpose.msra.mxu0 0
          %1219 = vmatprep.subr.bf16.mxu0 0
          %1220 = vmatpush1.bf16.xpose.msra.mxu0 0
          %1221 = vmatprep.subr.bf16.mxu0 0
          %1222 = vmatpush1.bf16.xpose.msra.mxu0 0
          %1223 = vmatprep.subr.bf16.mxu0 0
          %1224 = vmatpush1.bf16.xpose.msra.mxu0 %v1207
          %1225 = vmatprep.subr.bf16.mxu0 0
          %1226 = vmatpush2.bf16.xpose.msra.mxu0 0
          %1227 = vmatprep.subr.bf16.mxu0 0
          %1228 = vmatpush2.bf16.xpose.msra.mxu0 0
          %1229 = vmatprep.subr.bf16.mxu0 0
          %1230 = vmatpush2.bf16.xpose.msra.mxu0 0
          %1231 = vmatprep.subr.bf16.mxu0 0
          %1232 = vmatpush2.bf16.xpose.msra.mxu0 0
          %1233 = vmatprep.subr.bf16.mxu0 0
          %1234 = vmatpush2.bf16.xpose.msra.mxu0 0
          %1235 = vmatprep.subr.bf16.mxu0 0
          %1236 = vmatpush2.bf16.xpose.msra.mxu0 0
          %1237 = vmatprep.subr.bf16.mxu0 0
          %1238 = vmatpush2.bf16.xpose.msra.mxu0 0
          %1239 = vmatprep.subr.bf16.mxu0 0
          %1240 = vmatpush2.bf16.xpose.msra.mxu0 0
          %1241 = vmatprep.mubr.bf16.mxu0 0
          %1242 = vmatmul.mubr.bf16.gmra.mxu0 %v1204
          %v1243 = vpop.f32.mrf.mxu0
          %v1244 = vadd.f32 %v1055, %v1243
          %v1245 = vpop.f32.mrf.mxu0
          %v1246 = vpop.f32.mrf.mxu0
          %v1247 = vadd.f32 %v1056, %v1246
          %v1248 = vpop.f32.mrf.mxu0
          %1249 = vdwg.mxu0
          %v1250 = vsel %vm1077, %v1244, -inf
          %1251 = vmax.xlane.f32.xlu0 %v1250
          %v1252 = vpop.xlane.xlu0 %1251
          %v1253 = vsel %vm1077, %v1247, -inf
          %1254 = vmax.xlane.f32.xlu0 %v1253
          %v1255 = vpop.xlane.xlu0 %1254
          %v1256 = vsub.f32 %v1244, %v1252
          %v1257 = vsub.f32 %v1247, %v1255
          %v1258 = vmul.f32 %v1256, 1.442695
          %v1259 = vpow.pop %v1258
          %v1260 = vmul.f32 %v1257, 1.442695
          %v1261 = vpow.pop %v1260
          %v1262 = vsel %vm1077, %v1259, 0.0
          %1263 = vadd.xlane.f32.xlu0 %v1262
          %v1264 = vpop.xlane.xlu0 %1263
          %v1265 = vsel %vm1077, %v1261, 0.0
          %1266 = vadd.xlane.f32.xlu0 %v1265
          %v1267 = vpop.xlane.xlu0 %1266
          %v1268 = vrcp.pop %v1264
          %v1269 = vrcp.pop %v1267
          %v1270 = vmul.f32 %v1259, %v1268
          %v1271 = vmul.f32 %v1261, %v1269
          %v1272 = vpack.c.bf16 %v1271, %v1270
          %1273 = vrot.lane.b32.xlu0 %v1152, 112
          %v1274 = vpop.permute.xlu0 %1273
          %v1277 = vsel %vm1077, %v1272, 0
          %1279 = vmatprep.subr.bf16.mxu0 0
          %1280 = vmatpush1.bf16.msra.mxu0 0
          %1281 = vmatprep.subr.bf16.mxu0 0
          %1282 = vmatpush1.bf16.msra.mxu0 0
          %1283 = vmatprep.subr.bf16.mxu0 0
          %1284 = vmatpush1.bf16.msra.mxu0 0
          %1285 = vmatprep.subr.bf16.mxu0 0
          %1286 = vmatpush1.bf16.msra.mxu0 0
          %1287 = vmatprep.subr.bf16.mxu0 0
          %1288 = vmatpush1.bf16.msra.mxu0 0
          %1289 = vmatprep.subr.bf16.mxu0 0
          %1290 = vmatpush1.bf16.msra.mxu0 0
          %1291 = vmatprep.subr.bf16.mxu0 0
          %1292 = vmatpush1.bf16.msra.mxu0 0
          %1293 = vmatprep.subr.bf16.mxu0 0
          %1294 = vmatpush1.bf16.msra.mxu0 %v1274
          %1295 = vmatprep.subr.bf16.mxu0 0
          %1296 = vmatpush2.bf16.msra.mxu0 0
          %1297 = vmatprep.subr.bf16.mxu0 0
          %1298 = vmatpush2.bf16.msra.mxu0 0
          %1299 = vmatprep.subr.bf16.mxu0 0
          %1300 = vmatpush2.bf16.msra.mxu0 0
          %1301 = vmatprep.subr.bf16.mxu0 0
          %1302 = vmatpush2.bf16.msra.mxu0 0
          %1303 = vmatprep.subr.bf16.mxu0 0
          %1304 = vmatpush2.bf16.msra.mxu0 0
          %1305 = vmatprep.subr.bf16.mxu0 0
          %1306 = vmatpush2.bf16.msra.mxu0 0
          %1307 = vmatprep.subr.bf16.mxu0 0
          %1308 = vmatpush2.bf16.msra.mxu0 0
          %1309 = vmatprep.subr.bf16.mxu0 0
          %1310 = vmatpush2.bf16.msra.mxu0 0
          %1311 = vmatprep.mubr.bf16.mxu0 0
          %1312 = vmatmul.mubr.bf16.gmra.mxu0 %v1277
          %v1313 = vpop.f32.mrf.mxu0
          %v1314 = vadd.f32 0.0, %v1313
          %v1315 = vpop.f32.mrf.mxu0
          %v1316 = vpop.f32.mrf.mxu0
          %v1317 = vadd.f32 0.0, %v1316
          %v1318 = vpop.f32.mrf.mxu0
          %1319 = vdwg.mxu0
          %v1320 = vpack.c.bf16 %v1317, %v1314
          %1321 = vrot.lane.b32.xlu0 %v1074, 96
          %v1322 = vpop.permute.xlu0 %1321
          %1323 = vrot.lane.b32.xlu0 %v1074, 32
          %v1324 = vpop.permute.xlu0 %1323
          %v1326 = vsel %vm1077, %v1322, 0
          %v1329 = vsel %vm1077, %v1324, 0
          %1331 = vmatprep.subr.bf16.mxu0 0
          %1332 = vmatpush1.bf16.xpose.msra.mxu0 0
          %1333 = vmatprep.subr.bf16.mxu0 0
          %1334 = vmatpush1.bf16.xpose.msra.mxu0 0
          %1335 = vmatprep.subr.bf16.mxu0 0
          %1336 = vmatpush1.bf16.xpose.msra.mxu0 0
          %1337 = vmatprep.subr.bf16.mxu0 0
          %1338 = vmatpush1.bf16.xpose.msra.mxu0 0
          %1339 = vmatprep.subr.bf16.mxu0 0
          %1340 = vmatpush1.bf16.xpose.msra.mxu0 0
          %1341 = vmatprep.subr.bf16.mxu0 0
          %1342 = vmatpush1.bf16.xpose.msra.mxu0 0
          %1343 = vmatprep.subr.bf16.mxu0 0
          %1344 = vmatpush1.bf16.xpose.msra.mxu0 0
          %1345 = vmatprep.subr.bf16.mxu0 0
          %1346 = vmatpush1.bf16.xpose.msra.mxu0 %v1329
          %1347 = vmatprep.subr.bf16.mxu0 0
          %1348 = vmatpush2.bf16.xpose.msra.mxu0 0
          %1349 = vmatprep.subr.bf16.mxu0 0
          %1350 = vmatpush2.bf16.xpose.msra.mxu0 0
          %1351 = vmatprep.subr.bf16.mxu0 0
          %1352 = vmatpush2.bf16.xpose.msra.mxu0 0
          %1353 = vmatprep.subr.bf16.mxu0 0
          %1354 = vmatpush2.bf16.xpose.msra.mxu0 0
          %1355 = vmatprep.subr.bf16.mxu0 0
          %1356 = vmatpush2.bf16.xpose.msra.mxu0 0
          %1357 = vmatprep.subr.bf16.mxu0 0
          %1358 = vmatpush2.bf16.xpose.msra.mxu0 0
          %1359 = vmatprep.subr.bf16.mxu0 0
          %1360 = vmatpush2.bf16.xpose.msra.mxu0 0
          %1361 = vmatprep.subr.bf16.mxu0 0
          %1362 = vmatpush2.bf16.xpose.msra.mxu0 0
          %1363 = vmatprep.mubr.bf16.mxu0 0
          %1364 = vmatmul.mubr.bf16.gmra.mxu0 %v1326
          %v1365 = vpop.f32.mrf.mxu0
          %v1366 = vadd.f32 %v1055, %v1365
          %v1367 = vpop.f32.mrf.mxu0
          %v1368 = vpop.f32.mrf.mxu0
          %v1369 = vadd.f32 %v1056, %v1368
          %v1370 = vpop.f32.mrf.mxu0
          %1371 = vdwg.mxu0
          %v1372 = vsel %vm1077, %v1366, -inf
          %1373 = vmax.xlane.f32.xlu0 %v1372
          %v1374 = vpop.xlane.xlu0 %1373
          %v1375 = vsel %vm1077, %v1369, -inf
          %1376 = vmax.xlane.f32.xlu0 %v1375
          %v1377 = vpop.xlane.xlu0 %1376
          %v1378 = vsub.f32 %v1366, %v1374
          %v1379 = vsub.f32 %v1369, %v1377
          %v1380 = vmul.f32 %v1378, 1.442695
          %v1381 = vpow.pop %v1380
          %v1382 = vmul.f32 %v1379, 1.442695
          %v1383 = vpow.pop %v1382
          %v1384 = vsel %vm1077, %v1381, 0.0
          %1385 = vadd.xlane.f32.xlu0 %v1384
          %v1386 = vpop.xlane.xlu0 %1385
          %v1387 = vsel %vm1077, %v1383, 0.0
          %1388 = vadd.xlane.f32.xlu0 %v1387
          %v1389 = vpop.xlane.xlu0 %1388
          %v1390 = vrcp.pop %v1386
          %v1391 = vrcp.pop %v1389
          %v1392 = vmul.f32 %v1381, %v1390
          %v1393 = vmul.f32 %v1383, %v1391
          %v1394 = vpack.c.bf16 %v1393, %v1392
          %1395 = vrot.lane.b32.xlu0 %v1152, 96
          %v1396 = vpop.permute.xlu0 %1395
          %v1399 = vsel %vm1077, %v1394, 0
          %1401 = vmatprep.subr.bf16.mxu0 0
          %1402 = vmatpush1.bf16.msra.mxu0 0
          %1403 = vmatprep.subr.bf16.mxu0 0
          %1404 = vmatpush1.bf16.msra.mxu0 0
          %1405 = vmatprep.subr.bf16.mxu0 0
          %1406 = vmatpush1.bf16.msra.mxu0 0
          %1407 = vmatprep.subr.bf16.mxu0 0
          %1408 = vmatpush1.bf16.msra.mxu0 0
          %1409 = vmatprep.subr.bf16.mxu0 0
          %1410 = vmatpush1.bf16.msra.mxu0 0
          %1411 = vmatprep.subr.bf16.mxu0 0
          %1412 = vmatpush1.bf16.msra.mxu0 0
          %1413 = vmatprep.subr.bf16.mxu0 0
          %1414 = vmatpush1.bf16.msra.mxu0 0
          %1415 = vmatprep.subr.bf16.mxu0 0
          %1416 = vmatpush1.bf16.msra.mxu0 %v1396
          %1417 = vmatprep.subr.bf16.mxu0 0
          %1418 = vmatpush2.bf16.msra.mxu0 0
          %1419 = vmatprep.subr.bf16.mxu0 0
          %1420 = vmatpush2.bf16.msra.mxu0 0
          %1421 = vmatprep.subr.bf16.mxu0 0
          %1422 = vmatpush2.bf16.msra.mxu0 0
          %1423 = vmatprep.subr.bf16.mxu0 0
          %1424 = vmatpush2.bf16.msra.mxu0 0
          %1425 = vmatprep.subr.bf16.mxu0 0
          %1426 = vmatpush2.bf16.msra.mxu0 0
          %1427 = vmatprep.subr.bf16.mxu0 0
          %1428 = vmatpush2.bf16.msra.mxu0 0
          %1429 = vmatprep.subr.bf16.mxu0 0
          %1430 = vmatpush2.bf16.msra.mxu0 0
          %1431 = vmatprep.subr.bf16.mxu0 0
          %1432 = vmatpush2.bf16.msra.mxu0 0
          %1433 = vmatprep.mubr.bf16.mxu0 0
          %1434 = vmatmul.mubr.bf16.gmra.mxu0 %v1399
          %v1435 = vpop.f32.mrf.mxu0
          %v1436 = vadd.f32 0.0, %v1435
          %v1437 = vpop.f32.mrf.mxu0
          %v1438 = vpop.f32.mrf.mxu0
          %v1439 = vadd.f32 0.0, %v1438
          %v1440 = vpop.f32.mrf.mxu0
          %1441 = vdwg.mxu0
          %v1442 = vpack.c.bf16 %v1439, %v1436
          %1443 = vrot.lane.b32.xlu0 %v1074, 80
          %v1444 = vpop.permute.xlu0 %1443
          %1445 = vrot.lane.b32.xlu0 %v1074, 16
          %v1446 = vpop.permute.xlu0 %1445
          %v1448 = vsel %vm1077, %v1444, 0
          %v1451 = vsel %vm1077, %v1446, 0
          %1453 = vmatprep.subr.bf16.mxu0 0
          %1454 = vmatpush1.bf16.xpose.msra.mxu0 0
          %1455 = vmatprep.subr.bf16.mxu0 0
          %1456 = vmatpush1.bf16.xpose.msra.mxu0 0
          %1457 = vmatprep.subr.bf16.mxu0 0
          %1458 = vmatpush1.bf16.xpose.msra.mxu0 0
          %1459 = vmatprep.subr.bf16.mxu0 0
          %1460 = vmatpush1.bf16.xpose.msra.mxu0 0
          %1461 = vmatprep.subr.bf16.mxu0 0
          %1462 = vmatpush1.bf16.xpose.msra.mxu0 0
          %1463 = vmatprep.subr.bf16.mxu0 0
          %1464 = vmatpush1.bf16.xpose.msra.mxu0 0
          %1465 = vmatprep.subr.bf16.mxu0 0
          %1466 = vmatpush1.bf16.xpose.msra.mxu0 0
          %1467 = vmatprep.subr.bf16.mxu0 0
          %1468 = vmatpush1.bf16.xpose.msra.mxu0 %v1451
          %1469 = vmatprep.subr.bf16.mxu0 0
          %1470 = vmatpush2.bf16.xpose.msra.mxu0 0
          %1471 = vmatprep.subr.bf16.mxu0 0
          %1472 = vmatpush2.bf16.xpose.msra.mxu0 0
          %1473 = vmatprep.subr.bf16.mxu0 0
          %1474 = vmatpush2.bf16.xpose.msra.mxu0 0
          %1475 = vmatprep.subr.bf16.mxu0 0
          %1476 = vmatpush2.bf16.xpose.msra.mxu0 0
          %1477 = vmatprep.subr.bf16.mxu0 0
          %1478 = vmatpush2.bf16.xpose.msra.mxu0 0
          %1479 = vmatprep.subr.bf16.mxu0 0
          %1480 = vmatpush2.bf16.xpose.msra.mxu0 0
          %1481 = vmatprep.subr.bf16.mxu0 0
          %1482 = vmatpush2.bf16.xpose.msra.mxu0 0
          %1483 = vmatprep.subr.bf16.mxu0 0
          %1484 = vmatpush2.bf16.xpose.msra.mxu0 0
          %1485 = vmatprep.mubr.bf16.mxu0 0
          %1486 = vmatmul.mubr.bf16.gmra.mxu0 %v1448
          %v1487 = vpop.f32.mrf.mxu0
          %v1488 = vadd.f32 %v1055, %v1487
          %v1489 = vpop.f32.mrf.mxu0
          %v1490 = vpop.f32.mrf.mxu0
          %v1491 = vadd.f32 %v1056, %v1490
          %v1492 = vpop.f32.mrf.mxu0
          %1493 = vdwg.mxu0
          %v1494 = vsel %vm1077, %v1488, -inf
          %1495 = vmax.xlane.f32.xlu0 %v1494
          %v1496 = vpop.xlane.xlu0 %1495
          %v1497 = vsel %vm1077, %v1491, -inf
          %1498 = vmax.xlane.f32.xlu0 %v1497
          %v1499 = vpop.xlane.xlu0 %1498
          %v1500 = vsub.f32 %v1488, %v1496
          %v1501 = vsub.f32 %v1491, %v1499
          %v1502 = vmul.f32 %v1500, 1.442695
          %v1503 = vpow.pop %v1502
          %v1504 = vmul.f32 %v1501, 1.442695
          %v1505 = vpow.pop %v1504
          %v1506 = vsel %vm1077, %v1503, 0.0
          %1507 = vadd.xlane.f32.xlu0 %v1506
          %v1508 = vpop.xlane.xlu0 %1507
          %v1509 = vsel %vm1077, %v1505, 0.0
          %1510 = vadd.xlane.f32.xlu0 %v1509
          %v1511 = vpop.xlane.xlu0 %1510
          %v1512 = vrcp.pop %v1508
          %v1513 = vrcp.pop %v1511
          %v1514 = vmul.f32 %v1503, %v1512
          %v1515 = vmul.f32 %v1505, %v1513
          %v1516 = vpack.c.bf16 %v1515, %v1514
          %1517 = vrot.lane.b32.xlu0 %v1152, 80
          %v1518 = vpop.permute.xlu0 %1517
          %v1521 = vsel %vm1077, %v1516, 0
          %1523 = vmatprep.subr.bf16.mxu0 0
          %1524 = vmatpush1.bf16.msra.mxu0 0
          %1525 = vmatprep.subr.bf16.mxu0 0
          %1526 = vmatpush1.bf16.msra.mxu0 0
          %1527 = vmatprep.subr.bf16.mxu0 0
          %1528 = vmatpush1.bf16.msra.mxu0 0
          %1529 = vmatprep.subr.bf16.mxu0 0
          %1530 = vmatpush1.bf16.msra.mxu0 0
          %1531 = vmatprep.subr.bf16.mxu0 0
          %1532 = vmatpush1.bf16.msra.mxu0 0
          %1533 = vmatprep.subr.bf16.mxu0 0
          %1534 = vmatpush1.bf16.msra.mxu0 0
          %1535 = vmatprep.subr.bf16.mxu0 0
          %1536 = vmatpush1.bf16.msra.mxu0 0
          %1537 = vmatprep.subr.bf16.mxu0 0
          %1538 = vmatpush1.bf16.msra.mxu0 %v1518
          %1539 = vmatprep.subr.bf16.mxu0 0
          %1540 = vmatpush2.bf16.msra.mxu0 0
          %1541 = vmatprep.subr.bf16.mxu0 0
          %1542 = vmatpush2.bf16.msra.mxu0 0
          %1543 = vmatprep.subr.bf16.mxu0 0
          %1544 = vmatpush2.bf16.msra.mxu0 0
          %1545 = vmatprep.subr.bf16.mxu0 0
          %1546 = vmatpush2.bf16.msra.mxu0 0
          %1547 = vmatprep.subr.bf16.mxu0 0
          %1548 = vmatpush2.bf16.msra.mxu0 0
          %1549 = vmatprep.subr.bf16.mxu0 0
          %1550 = vmatpush2.bf16.msra.mxu0 0
          %1551 = vmatprep.subr.bf16.mxu0 0
          %1552 = vmatpush2.bf16.msra.mxu0 0
          %1553 = vmatprep.subr.bf16.mxu0 0
          %1554 = vmatpush2.bf16.msra.mxu0 0
          %1555 = vmatprep.mubr.bf16.mxu0 0
          %1556 = vmatmul.mubr.bf16.gmra.mxu0 %v1521
          %v1557 = vpop.f32.mrf.mxu0
          %v1558 = vadd.f32 0.0, %v1557
          %v1559 = vpop.f32.mrf.mxu0
          %v1560 = vpop.f32.mrf.mxu0
          %v1561 = vadd.f32 0.0, %v1560
          %v1562 = vpop.f32.mrf.mxu0
          %1563 = vdwg.mxu0
          %v1564 = vpack.c.bf16 %v1561, %v1558
          %1566 = vrot.lane.b32.xlu0 %v1320, 16
          %v1567 = vpop.permute.xlu0 %1566
          %1569 = vrot.lane.b32.xlu0 %v1442, 32
          %v1570 = vpop.permute.xlu0 %1569
          %1572 = vrot.lane.b32.xlu0 %v1564, 48
          %v1573 = vpop.permute.xlu0 %1572
          %v1576 = vsel %vm1077, %v1198, %v1567
          %vm1577 = vcmask 261120
          %v1579 = vsel %vm1577, %v1576, %v1570
          %vm1580 = vcmask 392192
          %v1582 = vsel %vm1580, %v1579, %v1573
          %v1584 = vunpack.c.l.b16 %v1582
          %v1585 = vunpack.c.h.b16 %v1582
          %v1586 = vpack.c.b16 %v1584, %v1584
          %v1587 = vpack.c.b16 %v1585, %v1585
          %s1590 = smul.u32 %s1058, 2
          %s1591 = smul.addr %s1590, 4
          %s1592 = scalar_lea.vmem [#allocation3], %s1591
          %vm1593 = vcmask 519168
          %1594 = vst.msk [vmem:[%s1592] sm:$0xf] %vm1593, %v1586
          %1595 = vst.msk [vmem:[%s1592 + $0x4] sm:$0xf] %vm1593, %v1587
        $region109: #{tpu_custom_call.1} parent=79 // loop_footer
          %s1062 = sadd.s32 1, %s1058
        $region110: #{tpu_custom_call.1} parent=79 // loop_footer_branch
          %1057 = sbr.rel target = $region106
        $region111: #{tpu_custom_call.1} parent=79 // loop_exit
          _
        %v1596 = vld [vmem:[#allocation3] sm:$0xf]
        %v1597 = vld [vmem:[#allocation3 + $0x4] sm:$0xf]
        %v1598 = vld [vmem:[#allocation3 + $0x8] sm:$0xf]
        %v1599 = vld [vmem:[#allocation3 + $0xc] sm:$0xf]
        %v1600 = vld [vmem:[%s784] sm:$0xf]
        %v1601 = vld [vmem:[%s784 + $0x4] sm:$0xf]
        %v1602 = vld [vmem:[%s784 + $0x8] sm:$0xf]
        %v1603 = vld [vmem:[%s784 + $0xc] sm:$0xf]
        %v1604 = vld [vmem:[%s784 + $0x10] sm:$0xf]
        %v1605 = vld [vmem:[%s784 + $0x14] sm:$0xf]
        %v1606 = vld [vmem:[%s784 + $0x18] sm:$0xf]
        %v1607 = vld [vmem:[%s784 + $0x1c] sm:$0xf]
        %v1612 = vunpack.c.l.b16 %v1596
        %v1613 = vunpack.c.l.b16 %v1597
        %v1614 = vunpack.c.l.b16 %v1598
        %v1615 = vunpack.c.l.b16 %v1599
        %v1616 = vpack.c.b16 %v1613, %v1612
        %v1617 = vpack.c.b16 %v1615, %v1614
        %v1626 = vunpack.c.l.b16 %v1600
        %v1627 = vunpack.c.l.b16 %v1601
        %v1628 = vunpack.c.l.b16 %v1602
        %v1629 = vunpack.c.l.b16 %v1603
        %v1630 = vunpack.c.l.b16 %v1604
        %v1631 = vunpack.c.l.b16 %v1605
        %v1632 = vunpack.c.l.b16 %v1606
        %v1633 = vunpack.c.l.b16 %v1607
        %v1634 = vpack.c.b16 %v1627, %v1626
        %v1635 = vpack.c.b16 %v1629, %v1628
        %v1636 = vpack.c.b16 %v1631, %v1630
        %v1637 = vpack.c.b16 %v1633, %v1632
        %v1643 = vsel %vm829, %v1616, 0
        %v1646 = vsel %vm829, %v1617, 0
        %1648 = vmatprep.subr.bf16.mxu0 0
        %1649 = vmatpush1.bf16.msra.mxu0 0
        %1650 = vmatprep.subr.bf16.mxu0 0
        %1651 = vmatpush1.bf16.msra.mxu0 0
        %1652 = vmatprep.subr.bf16.mxu0 0
        %1653 = vmatpush1.bf16.msra.mxu0 0
        %1654 = vmatprep.subr.bf16.mxu0 0
        %1655 = vmatpush1.bf16.msra.mxu0 0
        %1656 = vmatprep.subr.bf16.mxu0 0
        %1657 = vmatpush1.bf16.msra.mxu0 %v1637
        %1658 = vmatprep.subr.bf16.mxu0 0
        %1659 = vmatpush1.bf16.msra.mxu0 %v1636
        %1660 = vmatprep.subr.bf16.mxu0 0
        %1661 = vmatpush1.bf16.msra.mxu0 %v1635
        %1662 = vmatprep.subr.bf16.mxu0 0
        %1663 = vmatpush1.bf16.msra.mxu0 %v1634
        %1664 = vmatprep.subr.bf16.mxu0 0
        %1665 = vmatpush2.bf16.msra.mxu0 0
        %1666 = vmatprep.subr.bf16.mxu0 0
        %1667 = vmatpush2.bf16.msra.mxu0 0
        %1668 = vmatprep.subr.bf16.mxu0 0
        %1669 = vmatpush2.bf16.msra.mxu0 0
        %1670 = vmatprep.subr.bf16.mxu0 0
        %1671 = vmatpush2.bf16.msra.mxu0 0
        %1672 = vmatprep.subr.bf16.mxu0 0
        %1673 = vmatpush2.bf16.msra.mxu0 0
        %1674 = vmatprep.subr.bf16.mxu0 0
        %1675 = vmatpush2.bf16.msra.mxu0 0
        %1676 = vmatprep.subr.bf16.mxu0 0
        %1677 = vmatpush2.bf16.msra.mxu0 0
        %1678 = vmatprep.subr.bf16.mxu0 0
        %1679 = vmatpush2.bf16.msra.mxu0 0
        %1680 = vmatprep.mubr.bf16.mxu0 0
        %1681 = vmatmul.mubr.bf16.gmra.mxu0 %v1643
        %v1682 = vpop.f32.mrf.mxu0
        %v1683 = vadd.f32 0.0, %v1682
        %v1684 = vpop.f32.mrf.mxu0
        %v1685 = vpop.f32.mrf.mxu0
        %v1686 = vadd.f32 0.0, %v1685
        %v1687 = vpop.f32.mrf.mxu0
        %1688 = vmatprep.mubr.bf16.mxu0 0
        %1689 = vmatmul.mubr.bf16.gmra.mxu0 %v1646
        %v1690 = vpop.f32.mrf.mxu0
        %v1691 = vadd.f32 0.0, %v1690
        %v1692 = vpop.f32.mrf.mxu0
        %v1693 = vpop.f32.mrf.mxu0
        %v1694 = vadd.f32 0.0, %v1693
        %v1695 = vpop.f32.mrf.mxu0
        %1696 = vdwg.mxu0
        %v1697 = vadd.f32 %v823, %v1683
        %v1698 = vadd.f32 %v824, %v1686
        %v1699 = vadd.f32 %v825, %v1691
        %v1700 = vadd.f32 %v826, %v1694
        %v1701 = vld [vmem:[%s633] sm:$0x1]
        %v1703 = vlaneseq
        %v1704 = vshrl.u32 %v1703, 7
        %v1705 = vsub.s32 0, %v1704
        %v1706 = vrot.slane %v1701, %v1705
        %v1708 = vadd.f32 %v1697, %v1706
        %v1709 = vadd.f32 %v1698, %v1706
        %v1710 = vadd.f32 %v1699, %v1706
        %v1711 = vadd.f32 %v1700, %v1706
        %v1712 = vld [vmem:[%s657] sm:$0x1]
        %v1713 = vld [vmem:[%s665] sm:$0x1]
        %v1714 = vsel %vm829, %v1708, 0.0
        %1715 = vadd.xlane.f32.xlu0 %v1714
        %v1716 = vpop.xlane.xlu0 %1715
        %v1717 = vsel %vm829, %v1709, 0.0
        %1718 = vadd.xlane.f32.xlu0 %v1717
        %v1719 = vpop.xlane.xlu0 %1718
        %v1720 = vsel %vm829, %v1710, 0.0
        %1721 = vadd.xlane.f32.xlu0 %v1720
        %v1722 = vpop.xlane.xlu0 %1721
        %v1723 = vsel %vm829, %v1711, 0.0
        %1724 = vadd.xlane.f32.xlu0 %v1723
        %v1725 = vpop.xlane.xlu0 %1724
        %v1726 = vmul.f32 %v1716, %v842
        %v1727 = vmul.f32 %v1719, %v842
        %v1728 = vmul.f32 %v1722, %v842
        %v1729 = vmul.f32 %v1725, %v842
        %v1730 = vsub.f32 %v1708, %v1726
        %v1731 = vsub.f32 %v1709, %v1727
        %v1732 = vsub.f32 %v1710, %v1728
        %v1733 = vsub.f32 %v1711, %v1729
        %v1734 = vmul.f32 %v1730, %v1730
        %v1735 = vmul.f32 %v1731, %v1731
        %v1736 = vmul.f32 %v1732, %v1732
        %v1737 = vmul.f32 %v1733, %v1733
        %v1738 = vsel %vm829, %v1734, 0.0
        %1739 = vadd.xlane.f32.xlu0 %v1738
        %v1740 = vpop.xlane.xlu0 %1739
        %v1741 = vsel %vm829, %v1735, 0.0
        %1742 = vadd.xlane.f32.xlu0 %v1741
        %v1743 = vpop.xlane.xlu0 %1742
        %v1744 = vsel %vm829, %v1736, 0.0
        %1745 = vadd.xlane.f32.xlu0 %v1744
        %v1746 = vpop.xlane.xlu0 %1745
        %v1747 = vsel %vm829, %v1737, 0.0
        %1748 = vadd.xlane.f32.xlu0 %v1747
        %v1749 = vpop.xlane.xlu0 %1748
        %v1750 = vmul.f32 %v1740, %v842
        %v1751 = vmul.f32 %v1743, %v842
        %v1752 = vmul.f32 %v1746, %v842
        %v1753 = vmul.f32 %v1749, %v842
        %v1754 = vadd.f32 %v1750, 1e-05
        %v1755 = vadd.f32 %v1751, 1e-05
        %v1756 = vadd.f32 %v1752, 1e-05
        %v1757 = vadd.f32 %v1753, 1e-05
        %v1758 = vrsqrt.pop %v1754
        %v1759 = vrsqrt.pop %v1755
        %v1760 = vrsqrt.pop %v1756
        %v1761 = vrsqrt.pop %v1757
        %v1762 = vmul.f32 %v1730, %v1758
        %v1763 = vmul.f32 %v1731, %v1759
        %v1764 = vmul.f32 %v1732, %v1760
        %v1765 = vmul.f32 %v1733, %v1761
        %v1767 = vlaneseq
        %v1768 = vshrl.u32 %v1767, 7
        %v1769 = vsub.s32 0, %v1768
        %v1770 = vrot.slane %v1712, %v1769
        %v1772 = vmul.f32 %v1762, %v1770
        %v1773 = vmul.f32 %v1763, %v1770
        %v1774 = vmul.f32 %v1764, %v1770
        %v1775 = vmul.f32 %v1765, %v1770
        %v1777 = vlaneseq
        %v1778 = vshrl.u32 %v1777, 7
        %v1779 = vsub.s32 0, %v1778
        %v1780 = vrot.slane %v1713, %v1779
        %v1782 = vadd.f32 %v1772, %v1780
        %v1783 = vadd.f32 %v1773, %v1780
        %v1784 = vadd.f32 %v1774, %v1780
        %v1785 = vadd.f32 %v1775, %v1780
        %v1786 = vpack.c.bf16 %v1783, %v1782
        %v1787 = vpack.c.bf16 %v1785, %v1784
        %v1788 = vld [vmem:[%s789] sm:$0xff]
        %v1789 = vld [vmem:[%s789 + $0x8] sm:$0xff]
        %v1790 = vld [vmem:[%s789 + $0x10] sm:$0xff]
        %v1791 = vld [vmem:[%s789 + $0x18] sm:$0xff]
        %v1792 = vld [vmem:[%s789 + $0x20] sm:$0xff]
        %v1793 = vld [vmem:[%s789 + $0x28] sm:$0xff]
        %v1794 = vld [vmem:[%s789 + $0x30] sm:$0xff]
        %v1795 = vld [vmem:[%s789 + $0x38] sm:$0xff]
        %v1796 = vld [vmem:[%s793] sm:$0x3]
        %v1798 = vlaneseq
        %v1799 = vshrl.u32 %v1798, 7
        %v1800 = vsub.s32 0, %v1799
        %v1801 = vrot.slane %v1796, %v1800
        %v1802 = vlaneseq
        %v1803 = vshrl.u32 %v1802, 7
        %v1804 = vsub.s32 1, %v1803
        %v1805 = vrot.slane %v1796, %v1804
        %v1816 = vunpack.c.l.b16 %v1788
        %v1817 = vunpack.c.h.b16 %v1788
        %v1818 = vunpack.c.l.b16 %v1789
        %v1819 = vunpack.c.h.b16 %v1789
        %v1820 = vunpack.c.l.b16 %v1790
        %v1821 = vunpack.c.h.b16 %v1790
        %v1822 = vunpack.c.l.b16 %v1791
        %v1823 = vunpack.c.h.b16 %v1791
        %v1824 = vunpack.c.l.b16 %v1792
        %v1825 = vunpack.c.h.b16 %v1792
        %v1826 = vunpack.c.l.b16 %v1793
        %v1827 = vunpack.c.h.b16 %v1793
        %v1828 = vunpack.c.l.b16 %v1794
        %v1829 = vunpack.c.h.b16 %v1794
        %v1830 = vunpack.c.l.b16 %v1795
        %v1831 = vunpack.c.h.b16 %v1795
        %v1832 = vpack.c.b16 %v1818, %v1816
        %v1833 = vpack.c.b16 %v1819, %v1817
        %v1834 = vpack.c.b16 %v1822, %v1820
        %v1835 = vpack.c.b16 %v1823, %v1821
        %v1836 = vpack.c.b16 %v1826, %v1824
        %v1837 = vpack.c.b16 %v1827, %v1825
        %v1838 = vpack.c.b16 %v1830, %v1828
        %v1839 = vpack.c.b16 %v1831, %v1829
        %v1849 = vsel %vm829, %v1786, 0
        %v1852 = vsel %vm829, %v1787, 0
        %1854 = vmatprep.subr.bf16.mxu0 0
        %1855 = vmatpush1.bf16.msra.mxu0 0
        %1856 = vmatprep.subr.bf16.mxu0 0
        %1857 = vmatpush1.bf16.msra.mxu0 0
        %1858 = vmatprep.subr.bf16.mxu0 0
        %1859 = vmatpush1.bf16.msra.mxu0 0
        %1860 = vmatprep.subr.bf16.mxu0 0
        %1861 = vmatpush1.bf16.msra.mxu0 0
        %1862 = vmatprep.subr.bf16.mxu0 %v1839
        %1863 = vmatpush1.bf16.msra.mxu0 %v1838
        %1864 = vmatprep.subr.bf16.mxu0 %v1837
        %1865 = vmatpush1.bf16.msra.mxu0 %v1836
        %1866 = vmatprep.subr.bf16.mxu0 %v1835
        %1867 = vmatpush1.bf16.msra.mxu0 %v1834
        %1868 = vmatprep.subr.bf16.mxu0 %v1833
        %1869 = vmatpush1.bf16.msra.mxu0 %v1832
        %1870 = vmatprep.subr.bf16.mxu0 0
        %1871 = vmatpush2.bf16.msra.mxu0 0
        %1872 = vmatprep.subr.bf16.mxu0 0
        %1873 = vmatpush2.bf16.msra.mxu0 0
        %1874 = vmatprep.subr.bf16.mxu0 0
        %1875 = vmatpush2.bf16.msra.mxu0 0
        %1876 = vmatprep.subr.bf16.mxu0 0
        %1877 = vmatpush2.bf16.msra.mxu0 0
        %1878 = vmatprep.subr.bf16.mxu0 0
        %1879 = vmatpush2.bf16.msra.mxu0 0
        %1880 = vmatprep.subr.bf16.mxu0 0
        %1881 = vmatpush2.bf16.msra.mxu0 0
        %1882 = vmatprep.subr.bf16.mxu0 0
        %1883 = vmatpush2.bf16.msra.mxu0 0
        %1884 = vmatprep.subr.bf16.mxu0 0
        %1885 = vmatpush2.bf16.msra.mxu0 0
        %1886 = vmatprep.mubr.bf16.mxu0 0
        %1887 = vmatmul.mubr.bf16.gmra.mxu0 %v1849
        %v1888 = vpop.f32.mrf.mxu0
        %v1889 = vadd.f32 %v1801, %v1888
        %v1890 = vpop.f32.mrf.mxu0
        %v1891 = vadd.f32 %v1805, %v1890
        %v1892 = vpop.f32.mrf.mxu0
        %v1893 = vadd.f32 %v1801, %v1892
        %v1894 = vpop.f32.mrf.mxu0
        %v1895 = vadd.f32 %v1805, %v1894
        %1896 = vmatprep.mubr.bf16.mxu0 0
        %1897 = vmatmul.mubr.bf16.gmra.mxu0 %v1852
        %v1898 = vpop.f32.mrf.mxu0
        %v1899 = vadd.f32 %v1801, %v1898
        %v1900 = vpop.f32.mrf.mxu0
        %v1901 = vadd.f32 %v1805, %v1900
        %v1902 = vpop.f32.mrf.mxu0
        %v1903 = vadd.f32 %v1801, %v1902
        %v1904 = vpop.f32.mrf.mxu0
        %v1905 = vadd.f32 %v1805, %v1904
        %1906 = vdwg.mxu0
        %v1907 = vmul.f32 %v1889, 1.702
        %v1908 = vmul.f32 %v1891, 1.702
        %v1909 = vmul.f32 %v1893, 1.702
        %v1910 = vmul.f32 %v1895, 1.702
        %v1911 = vmul.f32 %v1899, 1.702
        %v1912 = vmul.f32 %v1901, 1.702
        %v1913 = vmul.f32 %v1903, 1.702
        %v1914 = vmul.f32 %v1905, 1.702
        %v1915 = vxor.u32 %v1907, 2147483648
        %v1916 = vxor.u32 %v1908, 2147483648
        %v1917 = vxor.u32 %v1909, 2147483648
        %v1918 = vxor.u32 %v1910, 2147483648
        %v1919 = vxor.u32 %v1911, 2147483648
        %v1920 = vxor.u32 %v1912, 2147483648
        %v1921 = vxor.u32 %v1913, 2147483648
        %v1922 = vxor.u32 %v1914, 2147483648
        %v1923 = vmul.f32 %v1915, 1.442695
        %v1924 = vpow.pop %v1923
        %v1925 = vmul.f32 %v1916, 1.442695
        %v1926 = vpow.pop %v1925
        %v1927 = vmul.f32 %v1917, 1.442695
        %v1928 = vpow.pop %v1927
        %v1929 = vmul.f32 %v1918, 1.442695
        %v1930 = vpow.pop %v1929
        %v1931 = vmul.f32 %v1919, 1.442695
        %v1932 = vpow.pop %v1931
        %v1933 = vmul.f32 %v1920, 1.442695
        %v1934 = vpow.pop %v1933
        %v1935 = vmul.f32 %v1921, 1.442695
        %v1936 = vpow.pop %v1935
        %v1937 = vmul.f32 %v1922, 1.442695
        %v1938 = vpow.pop %v1937
        %v1939 = vadd.f32 %v1924, 1.0
        %v1940 = vadd.f32 %v1926, 1.0
        %v1941 = vadd.f32 %v1928, 1.0
        %v1942 = vadd.f32 %v1930, 1.0
        %v1943 = vadd.f32 %v1932, 1.0
        %v1944 = vadd.f32 %v1934, 1.0
        %v1945 = vadd.f32 %v1936, 1.0
        %v1946 = vadd.f32 %v1938, 1.0
        %v1947 = vrcp.pop %v1939
        %v1948 = vmul.f32 1.0, %v1947
        %v1949 = vrcp.pop %v1940
        %v1950 = vmul.f32 1.0, %v1949
        %v1951 = vrcp.pop %v1941
        %v1952 = vmul.f32 1.0, %v1951
        %v1953 = vrcp.pop %v1942
        %v1954 = vmul.f32 1.0, %v1953
        %v1955 = vrcp.pop %v1943
        %v1956 = vmul.f32 1.0, %v1955
        %v1957 = vrcp.pop %v1944
        %v1958 = vmul.f32 1.0, %v1957
        %v1959 = vrcp.pop %v1945
        %v1960 = vmul.f32 1.0, %v1959
        %v1961 = vrcp.pop %v1946
        %v1962 = vmul.f32 1.0, %v1961
        %v1963 = vmul.f32 %v1889, %v1948
        %v1964 = vmul.f32 %v1891, %v1950
        %v1965 = vmul.f32 %v1893, %v1952
        %v1966 = vmul.f32 %v1895, %v1954
        %v1967 = vmul.f32 %v1899, %v1956
        %v1968 = vmul.f32 %v1901, %v1958
        %v1969 = vmul.f32 %v1903, %v1960
        %v1970 = vmul.f32 %v1905, %v1962
        %v1971 = vpack.c.bf16 %v1965, %v1963
        %v1972 = vpack.c.bf16 %v1966, %v1964
        %v1973 = vpack.c.bf16 %v1969, %v1967
        %v1974 = vpack.c.bf16 %v1970, %v1968
        %v1975 = vld [vmem:[%s798] sm:$0xf]
        %v1976 = vld [vmem:[%s798 + $0x4] sm:$0xf]
        %v1977 = vld [vmem:[%s798 + $0x8] sm:$0xf]
        %v1978 = vld [vmem:[%s798 + $0xc] sm:$0xf]
        %v1979 = vld [vmem:[%s798 + $0x10] sm:$0xf]
        %v1980 = vld [vmem:[%s798 + $0x14] sm:$0xf]
        %v1981 = vld [vmem:[%s798 + $0x18] sm:$0xf]
        %v1982 = vld [vmem:[%s798 + $0x1c] sm:$0xf]
        %v1983 = vld [vmem:[%s798 + $0x20] sm:$0xf]
        %v1984 = vld [vmem:[%s798 + $0x24] sm:$0xf]
        %v1985 = vld [vmem:[%s798 + $0x28] sm:$0xf]
        %v1986 = vld [vmem:[%s798 + $0x2c] sm:$0xf]
        %v1987 = vld [vmem:[%s798 + $0x30] sm:$0xf]
        %v1988 = vld [vmem:[%s798 + $0x34] sm:$0xf]
        %v1989 = vld [vmem:[%s798 + $0x38] sm:$0xf]
        %v1990 = vld [vmem:[%s798 + $0x3c] sm:$0xf]
        %v1991 = vld [vmem:[%s798 + $0x40] sm:$0xf]
        %v1992 = vld [vmem:[%s798 + $0x44] sm:$0xf]
        %v1993 = vld [vmem:[%s798 + $0x48] sm:$0xf]
        %v1994 = vld [vmem:[%s798 + $0x4c] sm:$0xf]
        %v1995 = vld [vmem:[%s798 + $0x50] sm:$0xf]
        %v1996 = vld [vmem:[%s798 + $0x54] sm:$0xf]
        %v1997 = vld [vmem:[%s798 + $0x58] sm:$0xf]
        %v1998 = vld [vmem:[%s798 + $0x5c] sm:$0xf]
        %v1999 = vld [vmem:[%s798 + $0x60] sm:$0xf]
        %v2000 = vld [vmem:[%s798 + $0x64] sm:$0xf]
        %v2001 = vld [vmem:[%s798 + $0x68] sm:$0xf]
        %v2002 = vld [vmem:[%s798 + $0x6c] sm:$0xf]
        %v2003 = vld [vmem:[%s798 + $0x70] sm:$0xf]
        %v2004 = vld [vmem:[%s798 + $0x74] sm:$0xf]
        %v2005 = vld [vmem:[%s798 + $0x78] sm:$0xf]
        %v2006 = vld [vmem:[%s798 + $0x7c] sm:$0xf]
        %v2007 = vld [vmem:[%s801] sm:$0x1]
        %v2009 = vlaneseq
        %v2010 = vshrl.u32 %v2009, 7
        %v2011 = vsub.s32 0, %v2010
        %v2012 = vrot.slane %v2007, %v2011
        %v2046 = vunpack.c.l.b16 %v1975
        %v2047 = vunpack.c.l.b16 %v1976
        %v2048 = vunpack.c.l.b16 %v1977
        %v2049 = vunpack.c.l.b16 %v1978
        %v2050 = vunpack.c.l.b16 %v1979
        %v2051 = vunpack.c.l.b16 %v1980
        %v2052 = vunpack.c.l.b16 %v1981
        %v2053 = vunpack.c.l.b16 %v1982
        %v2054 = vunpack.c.l.b16 %v1983
        %v2055 = vunpack.c.l.b16 %v1984
        %v2056 = vunpack.c.l.b16 %v1985
        %v2057 = vunpack.c.l.b16 %v1986
        %v2058 = vunpack.c.l.b16 %v1987
        %v2059 = vunpack.c.l.b16 %v1988
        %v2060 = vunpack.c.l.b16 %v1989
        %v2061 = vunpack.c.l.b16 %v1990
        %v2062 = vunpack.c.l.b16 %v1991
        %v2063 = vunpack.c.l.b16 %v1992
        %v2064 = vunpack.c.l.b16 %v1993
        %v2065 = vunpack.c.l.b16 %v1994
        %v2066 = vunpack.c.l.b16 %v1995
        %v2067 = vunpack.c.l.b16 %v1996
        %v2068 = vunpack.c.l.b16 %v1997
        %v2069 = vunpack.c.l.b16 %v1998
        %v2070 = vunpack.c.l.b16 %v1999
        %v2071 = vunpack.c.l.b16 %v2000
        %v2072 = vunpack.c.l.b16 %v2001
        %v2073 = vunpack.c.l.b16 %v2002
        %v2074 = vunpack.c.l.b16 %v2003
        %v2075 = vunpack.c.l.b16 %v2004
        %v2076 = vunpack.c.l.b16 %v2005
        %v2077 = vunpack.c.l.b16 %v2006
        %v2078 = vpack.c.b16 %v2047, %v2046
        %v2079 = vpack.c.b16 %v2049, %v2048
        %v2080 = vpack.c.b16 %v2051, %v2050
        %v2081 = vpack.c.b16 %v2053, %v2052
        %v2082 = vpack.c.b16 %v2055, %v2054
        %v2083 = vpack.c.b16 %v2057, %v2056
        %v2084 = vpack.c.b16 %v2059, %v2058
        %v2085 = vpack.c.b16 %v2061, %v2060
        %v2086 = vpack.c.b16 %v2063, %v2062
        %v2087 = vpack.c.b16 %v2065, %v2064
        %v2088 = vpack.c.b16 %v2067, %v2066
        %v2089 = vpack.c.b16 %v2069, %v2068
        %v2090 = vpack.c.b16 %v2071, %v2070
        %v2091 = vpack.c.b16 %v2073, %v2072
        %v2092 = vpack.c.b16 %v2075, %v2074
        %v2093 = vpack.c.b16 %v2077, %v2076
        %2110 = vmatprep.subr.bf16.mxu0 0
        %2111 = vmatpush1.bf16.msra.mxu0 %v2085
        %2112 = vmatprep.subr.bf16.mxu0 0
        %2113 = vmatpush1.bf16.msra.mxu0 %v2084
        %2114 = vmatprep.subr.bf16.mxu0 0
        %2115 = vmatpush1.bf16.msra.mxu0 %v2083
        %2116 = vmatprep.subr.bf16.mxu0 0
        %2117 = vmatpush1.bf16.msra.mxu0 %v2082
        %2118 = vmatprep.subr.bf16.mxu0 0
        %2119 = vmatpush1.bf16.msra.mxu0 %v2081
        %2120 = vmatprep.subr.bf16.mxu0 0
        %2121 = vmatpush1.bf16.msra.mxu0 %v2080
        %2122 = vmatprep.subr.bf16.mxu0 0
        %2123 = vmatpush1.bf16.msra.mxu0 %v2079
        %2124 = vmatprep.subr.bf16.mxu0 0
        %2125 = vmatpush1.bf16.msra.mxu0 %v2078
        %2126 = vmatprep.subr.bf16.mxu0 0
        %2127 = vmatpush2.bf16.msra.mxu0 %v2093
        %2128 = vmatprep.subr.bf16.mxu0 0
        %2129 = vmatpush2.bf16.msra.mxu0 %v2092
        %2130 = vmatprep.subr.bf16.mxu0 0
        %2131 = vmatpush2.bf16.msra.mxu0 %v2091
        %2132 = vmatprep.subr.bf16.mxu0 0
        %2133 = vmatpush2.bf16.msra.mxu0 %v2090
        %2134 = vmatprep.subr.bf16.mxu0 0
        %2135 = vmatpush2.bf16.msra.mxu0 %v2089
        %2136 = vmatprep.subr.bf16.mxu0 0
        %2137 = vmatpush2.bf16.msra.mxu0 %v2088
        %2138 = vmatprep.subr.bf16.mxu0 0
        %2139 = vmatpush2.bf16.msra.mxu0 %v2087
        %2140 = vmatprep.subr.bf16.mxu0 0
        %2141 = vmatpush2.bf16.msra.mxu0 %v2086
        %2142 = vmatprep.mubr.bf16.mxu0 %v1972
        %2143 = vmatmul.mubr.bf16.gmra.mxu0 %v1971
        %v2144 = vpop.f32.mrf.mxu0
        %v2145 = vadd.f32 %v2012, %v2144
        %v2146 = vpop.f32.mrf.mxu0
        %v2147 = vpop.f32.mrf.mxu0
        %v2148 = vadd.f32 %v2012, %v2147
        %v2149 = vpop.f32.mrf.mxu0
        %2150 = vmatprep.mubr.bf16.mxu0 %v1974
        %2151 = vmatmul.mubr.bf16.gmra.mxu0 %v1973
        %v2152 = vpop.f32.mrf.mxu0
        %v2153 = vadd.f32 %v2012, %v2152
        %v2154 = vpop.f32.mrf.mxu0
        %v2155 = vpop.f32.mrf.mxu0
        %v2156 = vadd.f32 %v2012, %v2155
        %v2157 = vpop.f32.mrf.mxu0
        %2158 = vdwg.mxu0
        %v2159 = vadd.f32 %v1708, %v2145
        %v2160 = vadd.f32 %v1709, %v2148
        %v2161 = vadd.f32 %v1710, %v2153
        %v2162 = vadd.f32 %v1711, %v2156
        %2163 = vst.msk [vmem:[%s763] sm:$0xff] %vm829, %v2159
        %2164 = vst.msk [vmem:[%s763 + $0x8] sm:$0xff] %vm829, %v2160
        %2165 = vst.msk [vmem:[%s763 + $0x10] sm:$0xff] %vm829, %v2161
        %2166 = vst.msk [vmem:[%s763 + $0x18] sm:$0xff] %vm829, %v2162
        %s2167 = sand.u32 %s438, 1
        %s2168 = scalar_lea.sflag [#allocation6], %s2167
        %s2169 = sand.u32 %s438, 1
        %s2170 = smul.addr %s2169, 32
        %s2171 = scalar_lea.vmem [#allocation13], %s2170
        // Predicated region
        $region112: #{tpu_custom_call.1} parent=79 // pred_check
          %p2172 = pneg %p448
        $region113: #{tpu_custom_call.1} parent=79 // pred_check_branch
          %2174 = sbr.rel (%p2172) target = $region115
        $region114: #{tpu_custom_call.1} parent=79 // pred_region
          %s2175 = smul.u32 2, %s42
          %s2177 = ssub.s32 512, 512
          %2178 = vsyncadd %s2168, %s2177
          %s2179 = smul.addr %s2175, 2
          %s2180 = smul.addr %s2179, 128
          %s2181 = scalar_lea.hbm %s15, %s2180
          %s2182 = sshll.u32 %s2171, 4
          %s2183 = int_to_ptr.vmem [resolvable:$true] %s2182
          %2188 = dma.vmem_to_hbm [thread:$0]  %s2183, 512, %s2181, %s2168, 128, 128, 8
        $region115: #{tpu_custom_call.1} parent=79 // pred_fallthru
          _
      $region80: #{tpu_custom_call.1} parent=5 // pred_fallthru
        _
      %p2189 = scmp.le.s32.totalorder 2, %s33
      // Predicated region
      $region116: #{tpu_custom_call.1} parent=5 // pred_check
        %p2190 = pneg %p2189
      $region117: #{tpu_custom_call.1} parent=5 // pred_check_branch
        %2192 = sbr.rel (%p2190) target = $region119
      $region118: #{tpu_custom_call.1} parent=5 // pred_region
        %s2193 = ssub.s32 %s33, 2
        // Predicated region
        $region120: #{tpu_custom_call.1} parent=118 // pred_check
          %p2194 = pneg %p454
        $region121: #{tpu_custom_call.1} parent=118 // pred_check_branch
          %2196 = sbr.rel (%p2194) target = $region123
        $region122: #{tpu_custom_call.1} parent=118 // pred_region
          %s2197 = sand.u32 %s439, 1
          %s2198 = scalar_lea.sflag [#allocation6], %s2197
          %s2199 = sand.u32 %s439, 1
          %s2200 = smul.addr %s2199, 32
          %s2201 = scalar_lea.vmem [#allocation13], %s2200
          %2202 = dma.done %s2198, 512
        $region123: #{tpu_custom_call.1} parent=118 // pred_fallthru
          _
      $region119: #{tpu_custom_call.1} parent=5 // pred_fallthru
        _
    $region6: #{tpu_custom_call.1} parent=1 // loop_footer
      %s37 = sadd.s32 1, %s33
    $region7: #{tpu_custom_call.1} parent=1 // loop_footer_branch
      %32 = sbr.rel target = $region3
    $region8: #{tpu_custom_call.1} parent=1 // loop_exit
      _
    %2203 = vsyncpa [#allocation5], 1
    %s2204 = scalar_lea.sflag [#allocation5], 1
    %2205 = vsyncpa %s2204, 1
    %2206 = vsyncpa [#allocation8], 1
    %s2207 = scalar_lea.sflag [#allocation8], 1
    %2208 = vsyncpa %s2207, 1
    %2209 = vsyncpa [#allocation11], 1
    %s2210 = scalar_lea.sflag [#allocation11], 1
    %2211 = vsyncpa %s2210, 1
    %2212 = vsyncpa [#allocation6], 1
    %s2213 = scalar_lea.sflag [#allocation6], 1
    %2214 = vsyncpa %s2213, 1

</llo_original>
